<compile_context>
chip_gen: v7x
topology: tpu7x:2x2x1
jax: 0.10.0
libtpu: 0.0.40
codegen_flags: <defaults>
</compile_context>

<pallas_src>
import functools
import math

import jax
import jax.numpy as jnp
from jax import lax
from jax.experimental import pallas as pl
from jax.experimental.pallas import tpu as pltpu


# ----------------------------- in-kernel helpers -----------------------------

def _layer_norm(x, a, b, eps=1e-6, approx=True):
    # x: (T, D), a/b: (1, D). Matches the PyTorch LayerNorm: unbiased std,
    # divide by (std + eps).  approx=True routes 1/(std+eps) to the EUP.
    d = x.shape[-1]
    mean = jnp.mean(x, axis=-1, keepdims=True)
    var = jnp.sum((x - mean) ** 2, axis=-1, keepdims=True) * (1.0 / (d - 1))
    std = jnp.sqrt(var)
    if approx:
        inv = pl.reciprocal(std + eps, approx=True)
    else:
        inv = 1.0 / (std + eps)
    return a * (x - mean) * inv + b


# ----------------------------- encoder-layer kernel --------------------------

def encoder_layer_kernel(x_ref, mask_ref,
                         wq_ref, bq_ref, wk_ref, bk_ref, wv_ref, bv_ref,
                         wo_ref, bo_ref, ln1a_ref, ln1b_ref,
                         w1_ref, b1_ref, w2_ref, b2_ref, ln2a_ref, ln2b_ref,
                         *rest, num_heads, fuse_final_norm):
    if fuse_final_norm:
        lnfa_ref, lnfb_ref, o_ref, k_sc, v_sc = rest
    else:
        o_ref, k_sc, v_sc = rest

    qi = pl.program_id(1)
    S, D = x_ref.shape                 # full sequence block (batch dim squeezed)
    Tq = o_ref.shape[0]                # query tile
    H = num_heads
    dk = D // H
    n_kv, _, Tk, _ = k_sc.shape        # KV scratch: (n_kv, H, Tk, dk) bf16
    n_ff = w1_ref.shape[0]             # FFN chunks: w1 (n_ff, D, Ck)

    # ---- K/V projection for the whole sequence: ONCE per batch element ----
    @pl.when(qi == 0)
    def _():
        xn_full = _layer_norm(x_ref[...], ln1a_ref[...], ln1b_ref[...])
        xb = xn_full.astype(jnp.bfloat16)
        k = (jnp.dot(xb, wk_ref[...], preferred_element_type=jnp.float32)
             + bk_ref[...]).astype(jnp.bfloat16)
        v = (jnp.dot(xb, wv_ref[...], preferred_element_type=jnp.float32)
             + bv_ref[...]).astype(jnp.bfloat16)
        # head-major, KV-chunked layout (bf16 relayout, once per batch element)
        k_sc[...] = k.reshape(n_kv, Tk, H, dk).transpose(0, 2, 1, 3)
        v_sc[...] = v.reshape(n_kv, Tk, H, dk).transpose(0, 2, 1, 3)

    # ---- query tile ----
    row0 = pl.multiple_of(qi * Tq, Tq)
    x_t = x_ref[pl.ds(row0, Tq), :]                          # (Tq, D) f32
    xn = _layer_norm(x_t, ln1a_ref[...], ln1b_ref[...])
    # wq/bq are pre-scaled by 1/sqrt(dk) at the wrapper.
    q = jnp.dot(xn.astype(jnp.bfloat16), wq_ref[...],
                preferred_element_type=jnp.float32) + bq_ref[...]
    qh = q.astype(jnp.bfloat16).reshape(Tq, H, dk).transpose(1, 0, 2)   # (H,Tq,dk)

    # ---- flash-style online softmax over KV chunks ----
    def kv_step(kvi, carry):
        m, l, acc = carry
        k_c = k_sc[kvi]                                      # (H, Tk, dk) bf16
        v_c = v_sc[kvi]                                      # (H, Tk, dk) bf16
        keep = mask_ref[kvi]                                 # (1, Tk) f32
        s = jnp.einsum("hqd,hkd->hqk", qh, k_c,
                       preferred_element_type=jnp.float32)   # (H, Tq, Tk) f32
        s = s + (keep - 1.0) * 1e9                           # additive mask
        m_new = jnp.maximum(m, jnp.max(s, axis=-1, keepdims=True))
        alpha = jnp.exp(m - m_new)
        # TODO(synk): on v6e/v7x, cast (s - m_new) to bf16 before exp (bf16 EUP);
        #             kept f32 here for v5e compatibility / tighter numerics.
        p = jnp.exp(s - m_new)
        l_new = alpha * l + jnp.sum(p, axis=-1, keepdims=True)
        acc_new = alpha * acc + jnp.einsum(
            "hqk,hkd->hqd", p.astype(jnp.bfloat16), v_c,
            preferred_element_type=jnp.float32)
        return m_new, l_new, acc_new

    m0 = jnp.full((H, Tq, 1), -jnp.inf, dtype=jnp.float32)
    l0 = jnp.zeros((H, Tq, 1), dtype=jnp.float32)
    a0 = jnp.zeros((H, Tq, dk), dtype=jnp.float32)
    m, l, acc = lax.fori_loop(0, n_kv, kv_step, (m0, l0, a0))

    # normalize AFTER the PV matmul (touches H*Tq*dk, not H*Tq*S)
    ctx = acc * pl.reciprocal(l, approx=True)
    ctx = ctx.astype(jnp.bfloat16).transpose(1, 0, 2).reshape(Tq, D)
    attn = jnp.dot(ctx, wo_ref[...], preferred_element_type=jnp.float32) + bo_ref[...]
    y = x_t + attn

    # ---- sublayer 1: y + FFN(LayerNorm(y)), streamed over Dff chunks ----
    xn2b = _layer_norm(y, ln2a_ref[...], ln2b_ref[...]).astype(jnp.bfloat16)

    def ff_step(c, ff):
        h = jnp.dot(xn2b, w1_ref[c], preferred_element_type=jnp.float32) + b1_ref[c]
        h = jnp.maximum(h, 0.0).astype(jnp.bfloat16)
        return ff + jnp.dot(h, w2_ref[c], preferred_element_type=jnp.float32)

    ff0 = jnp.zeros((Tq, D), jnp.float32) + b2_ref[...]
    ff = lax.fori_loop(0, n_ff, ff_step, ff0)
    y = y + ff

    # ---- fused final Encoder LayerNorm (last layer only; exact reciprocal) ----
    if fuse_final_norm:
        y = _layer_norm(y, lnfa_ref[...], lnfb_ref[...], approx=False)

    o_ref[...] = y


def final_norm_kernel(x_ref, a_ref, b_ref, o_ref):
    # Only used for the degenerate zero-layer Encoder.
    o_ref[...] = _layer_norm(x_ref[...], a_ref[...], b_ref[...], approx=False)


# ----------------------------- wrappers ---------------------------------------

def _pick_tile(n, candidates):
    for c in candidates:
        if c <= n and n % c == 0:
            return c
    return n


def prepare_layer_params(p, num_heads, ff_chunk):
    """Fold 1/sqrt(dk) into wq/bq, cast matmul weights to bf16, and pre-chunk the
    FFN weights so the kernel streams Dff with leading-axis indexing only."""
    D = p["wq"].shape[0]
    Dff = p["w1"].shape[1]
    dk = D // num_heads
    scale = 1.0 / math.sqrt(dk)
    n_ff = Dff // ff_chunk
    out = {}
    out["wq"] = (p["wq"] * scale).astype(jnp.bfloat16)
    out["bq"] = p["bq"] * scale
    for name in ("wk", "wv", "wo"):
        out[name] = p[name].astype(jnp.bfloat16)
    for name in ("bk", "bv", "bo", "b2", "ln1a", "ln1b", "ln2a", "ln2b"):
        out[name] = p[name]
    out["w1"] = (p["w1"].reshape(D, n_ff, ff_chunk)
                 .transpose(1, 0, 2).astype(jnp.bfloat16))      # (n_ff, D, Ck)
    out["b1"] = p["b1"].reshape(n_ff, 1, ff_chunk)              # (n_ff, 1, Ck)
    out["w2"] = p["w2"].reshape(n_ff, ff_chunk, D).astype(jnp.bfloat16)  # (n_ff, Ck, D)
    return out


def _vmem_limit_bytes(S, D, Dff, H, tq, tk, ck):
    dk = D // H
    weights = (4 * D * D + 2 * D * Dff) * 2          # bf16, single-buffered
    small = (12 * D + 2 * Dff) * 4
    x_blk = 2 * S * D * 4                            # x block, double-buffered
    out_blk = 2 * tq * D * 4
    kv_scr = 2 * S * D * 2                           # K/V scratch, bf16
    tmp = (6 * H * tq * tk * 4 + 4 * H * tq * dk * 4
           + 6 * tq * D * 4 + 3 * tq * ck * 4)
    est = weights + small + x_blk + out_blk + kv_scr + tmp
    # 2x headroom, floor 32 MiB.  NOTE: on v7x (64 MiB/TC) pick S/D/Dff tiles so
    # `est` stays under ~56 MiB; on v5e/v6e up to ~100 MiB is available.
    return int(min(max(2 * est, 32 * 1024 * 1024), 100 * 1024 * 1024))


def run_encoder_layer(x, mask_c, p, num_heads, tq, final_norm=None):
    B, S, D = x.shape
    n_kv, kv_tile = mask_c.shape[1], mask_c.shape[3]
    n_ff, _, ff_chunk = p["w1"].shape
    dk = D // num_heads
    nq = S // tq
    fuse = final_norm is not None
    kernel = functools.partial(encoder_layer_kernel, num_heads=num_heads,
                               fuse_final_norm=fuse)

    def _const(shape):
        nd = len(shape)
        # Constant index_map -> no re-DMA across steps; single-buffer it so the
        # resident weights take 1x (not 2x) VMEM.
        return pl.BlockSpec(shape, lambda b, q, _n=nd: (0,) * _n,
                            pipeline_mode=pl.Buffered(1))

    in_specs = [
        pl.BlockSpec((pl.Squeezed(), S, D), lambda b, q: (b, 0, 0)),          # x
        pl.BlockSpec((pl.Squeezed(), n_kv, 1, kv_tile),
                     lambda b, q: (b, 0, 0, 0)),                              # mask
        _const((D, D)), _const((1, D)),                   # wq, bq (pre-scaled)
        _const((D, D)), _const((1, D)),                   # wk, bk
        _const((D, D)), _const((1, D)),                   # wv, bv
        _const((D, D)), _const((1, D)),                   # wo, bo
        _const((1, D)), _const((1, D)),                   # ln1 a, b
        _const((n_ff, D, ff_chunk)), _const((n_ff, 1, ff_chunk)),   # w1, b1
        _const((n_ff, ff_chunk, D)), _const((1, D)),                # w2, b2
        _const((1, D)), _const((1, D)),                   # ln2 a, b
    ]
    inputs = [x, mask_c,
              p["wq"], p["bq"], p["wk"], p["bk"], p["wv"], p["bv"],
              p["wo"], p["bo"], p["ln1a"], p["ln1b"],
              p["w1"], p["b1"], p["w2"], p["b2"], p["ln2a"], p["ln2b"]]
    if fuse:
        in_specs += [_const((1, D)), _const((1, D))]      # final LN a, b
        inputs += [final_norm[0], final_norm[1]]

    # The q-tile axis must stay "arbitrary": K/V scratch is written at q-tile 0
    # and reused by later q-tiles of the same batch element.
    # TODO(synk): for B=1 on v7x (2 TCs), split K/V projection into its own call
    #             so the q-tile axis can be marked "parallel".
    return pl.pallas_call(
        kernel,
        out_shape=jax.ShapeDtypeStruct((B, S, D), jnp.float32),
        grid=(B, nq),
        in_specs=in_specs,
        out_specs=pl.BlockSpec((pl.Squeezed(), tq, D), lambda b, q: (b, q, 0)),
        scratch_shapes=[
            pltpu.VMEM((n_kv, num_heads, kv_tile, dk), jnp.bfloat16),   # K
            pltpu.VMEM((n_kv, num_heads, kv_tile, dk), jnp.bfloat16),   # V
        ],
        compiler_params=pltpu.CompilerParams(
            dimension_semantics=("parallel", "arbitrary"),
            vmem_limit_bytes=_vmem_limit_bytes(
                S, D, n_ff * ff_chunk, num_heads, tq, kv_tile, ff_chunk)),
    )(*inputs)


def run_final_norm(x, a, b):
    B, S, D = x.shape
    return pl.pallas_call(
        final_norm_kernel,
        out_shape=jax.ShapeDtypeStruct((B, S, D), jnp.float32),
        grid=(B,),
        in_specs=[pl.BlockSpec((pl.Squeezed(), S, D), lambda i: (i, 0, 0)),
                  pl.BlockSpec((1, D), lambda i: (0, 0)),
                  pl.BlockSpec((1, D), lambda i: (0, 0))],
        out_specs=pl.BlockSpec((pl.Squeezed(), S, D), lambda i: (i, 0, 0)),
        compiler_params=pltpu.CompilerParams(dimension_semantics=("parallel",)),
    )(x, a, b)


def encoder_forward(x, mask, layer_params, final_a, final_b, num_heads):
    if not layer_params:
        return run_final_norm(x, final_a, final_b)
    B, S, D = x.shape
    Dff = layer_params[0]["w1"].shape[1]
    tq = _pick_tile(S, (256, 128, 64, 32, 16, 8))       # query tile
    tk = _pick_tile(S, (512, 256, 128, 64, 32, 16))     # KV chunk
    ck = _pick_tile(Dff, (1024, 512, 256, 128))         # Dff chunk
    n_kv = S // tk
    mask_c = mask.reshape(B, n_kv, 1, tk)               # KV-chunked mask layout
    prepped = [prepare_layer_params(p, num_heads, ck) for p in layer_params]
    for i, p in enumerate(prepped):
        is_last = i == len(prepped) - 1
        x = run_encoder_layer(
            x, mask_c, p, num_heads, tq,
            final_norm=(final_a, final_b) if is_last else None)
    return x


# ----------------------------- pure-JAX reference -----------------------------

def _ref_layer_norm(x, a, b, eps=1e-6):
    d = x.shape[-1]
    mean = jnp.mean(x, axis=-1, keepdims=True)
    var = jnp.sum((x - mean) ** 2, axis=-1, keepdims=True) / (d - 1)
    std = jnp.sqrt(var)
    return a * (x - mean) / (std + eps) + b


def _ref_encoder(x, mask, layer_params, final_a, final_b, num_heads):
    B, S, D = x.shape
    dk = D // num_heads
    for p in layer_params:
        xn = _ref_layer_norm(x, p["ln1a"], p["ln1b"])
        q = xn @ p["wq"] + p["bq"]
        k = xn @ p["wk"] + p["bk"]
        v = xn @ p["wv"] + p["bv"]
        qh = q.reshape(B, S, num_heads, dk).transpose(0, 2, 1, 3)
        kh = k.reshape(B, S, num_heads, dk).transpose(0, 2, 1, 3)
        vh = v.reshape(B, S, num_heads, dk).transpose(0, 2, 1, 3)
        scores = jnp.einsum("bhqd,bhkd->bhqk", qh, kh) / math.sqrt(dk)
        scores = jnp.where(mask[:, None, :, :] == 0.0, -1e9, scores)
        attn = jax.nn.softmax(scores, axis=-1)
        ctx = jnp.einsum("bhqk,bhkd->bhqd", attn, vh)
        ctx = ctx.transpose(0, 2, 1, 3).reshape(B, S, D)
        x = x + ctx @ p["wo"] + p["bo"]
        xn2 = _ref_layer_norm(x, p["ln2a"], p["ln2b"])
        h1 = jnp.maximum(xn2 @ p["w1"] + p["b1"], 0.0)
        x = x + h1 @ p["w2"] + p["b2"]
    return _ref_layer_norm(x, final_a, final_b)


# ----------------------------- main -------------------------------------------

if __name__ == "__main__":
    B, S, D, H, DFF, N_LAYERS = 2, 8, 32, 4, 64, 2
    # NOTE: toy dims (D=32, dk=8) underfill the 128-lane vregs / MXU; realistic
    #       deployments should use D, dk multiples of 128 and S >= 256.

    key = jax.random.PRNGKey(0)

    def mk_params(k):
        ks = jax.random.split(k, 8)
        w = lambda kk, shape: (0.02 * jax.random.normal(kk, shape)).astype(jnp.float32)
        return {
            # weights stored pre-transposed: y = x @ W + b
            "wq": w(ks[0], (D, D)),   "bq": jnp.zeros((1, D), jnp.float32),
            "wk": w(ks[1], (D, D)),   "bk": jnp.zeros((1, D), jnp.float32),
            "wv": w(ks[2], (D, D)),   "bv": jnp.zeros((1, D), jnp.float32),
            "wo": w(ks[3], (D, D)),   "bo": jnp.zeros((1, D), jnp.float32),
            "ln1a": jnp.ones((1, D), jnp.float32), "ln1b": jnp.zeros((1, D), jnp.float32),
            "w1": w(ks[4], (D, DFF)), "b1": jnp.zeros((1, DFF), jnp.float32),
            "w2": w(ks[5], (DFF, D)), "b2": jnp.zeros((1, D), jnp.float32),
            "ln2a": jnp.ones((1, D), jnp.float32), "ln2b": jnp.zeros((1, D), jnp.float32),
        }

    key, *layer_keys = jax.random.split(key, N_LAYERS + 1)
    layer_params = [mk_params(k) for k in layer_keys]
    final_a = jnp.ones((1, D), jnp.float32)
    final_b = jnp.zeros((1, D), jnp.float32)

    key, xk = jax.random.split(key)
    x = jax.random.normal(xk, (B, S, D), dtype=jnp.float32)
    # mask: keep all but the last two positions of batch element 1
    mask = jnp.ones((B, 1, S), dtype=jnp.float32)
    mask = mask.at[1, 0, -2:].set(0.0)

    out = encoder_forward(x, mask, layer_params, final_a, final_b, H)
    out = jax.block_until_ready(out)

    ref = _ref_encoder(x, mask, layer_params, final_a, final_b, H)
    assert out.shape == (B, S, D)
    # bf16 matmuls + approx reciprocals => compare against the f32 reference with
    # a correspondingly looser tolerance.
    assert jnp.allclose(out, ref, atol=2e-2, rtol=2e-2), "mismatch vs reference"

    print("KERNEL_OK")
</pallas_src>

<mosaic_0001>
module attributes {stable_mosaic.version = 11 : i64} {
  func.func @encoder_layer_kernel(%arg0: i32, %arg1: i32, %arg2: memref<1x8x32xf32, #tpu.memory_space<vmem>>, %arg3: memref<1x1x1x8xf32, #tpu.memory_space<vmem>>, %arg4: memref<32x32xbf16, #tpu.memory_space<vmem>>, %arg5: memref<1x32xf32, #tpu.memory_space<vmem>>, %arg6: memref<32x32xbf16, #tpu.memory_space<vmem>>, %arg7: memref<1x32xf32, #tpu.memory_space<vmem>>, %arg8: memref<32x32xbf16, #tpu.memory_space<vmem>>, %arg9: memref<1x32xf32, #tpu.memory_space<vmem>>, %arg10: memref<32x32xbf16, #tpu.memory_space<vmem>>, %arg11: memref<1x32xf32, #tpu.memory_space<vmem>>, %arg12: memref<1x32xf32, #tpu.memory_space<vmem>>, %arg13: memref<1x32xf32, #tpu.memory_space<vmem>>, %arg14: memref<1x32x64xbf16, #tpu.memory_space<vmem>>, %arg15: memref<1x1x64xf32, #tpu.memory_space<vmem>>, %arg16: memref<1x64x32xbf16, #tpu.memory_space<vmem>>, %arg17: memref<1x32xf32, #tpu.memory_space<vmem>>, %arg18: memref<1x32xf32, #tpu.memory_space<vmem>>, %arg19: memref<1x32xf32, #tpu.memory_space<vmem>>, %arg20: memref<1x8x32xf32, #tpu.memory_space<vmem>>, %arg21: memref<1x4x8x8xbf16, #tpu.memory_space<vmem>>, %arg22: memref<1x4x8x8xbf16, #tpu.memory_space<vmem>>) attributes {dimension_semantics = [#tpu.dimension_semantics<parallel>, #tpu.dimension_semantics<arbitrary>], iteration_bounds = array<i64: 2, 1>, scalar_prefetch = 0 : i64, scratch_operands = 2 : i64, tpu.core_type = #tpu.core_type<tc>, window_params = [{transform_indices = @transform_0, window_bounds = array<i64: 1, 8, 32>}, {transform_indices = @transform_1, window_bounds = array<i64: 1, 1, 1, 8>}, {pipeline_mode = #tpu.pipeline_mode<synchronous>, transform_indices = @transform_2, window_bounds = array<i64: 32, 32>}, {pipeline_mode = #tpu.pipeline_mode<synchronous>, transform_indices = @transform_3, window_bounds = array<i64: 1, 32>}, {pipeline_mode = #tpu.pipeline_mode<synchronous>, transform_indices = @transform_4, window_bounds = array<i64: 32, 32>}, {pipeline_mode = #tpu.pipeline_mode<synchronous>, transform_indices = @transform_5, window_bounds = array<i64: 1, 32>}, {pipeline_mode = #tpu.pipeline_mode<synchronous>, transform_indices = @transform_6, window_bounds = array<i64: 32, 32>}, {pipeline_mode = #tpu.pipeline_mode<synchronous>, transform_indices = @transform_7, window_bounds = array<i64: 1, 32>}, {pipeline_mode = #tpu.pipeline_mode<synchronous>, transform_indices = @transform_8, window_bounds = array<i64: 32, 32>}, {pipeline_mode = #tpu.pipeline_mode<synchronous>, transform_indices = @transform_9, window_bounds = array<i64: 1, 32>}, {pipeline_mode = #tpu.pipeline_mode<synchronous>, transform_indices = @transform_10, window_bounds = array<i64: 1, 32>}, {pipeline_mode = #tpu.pipeline_mode<synchronous>, transform_indices = @transform_11, window_bounds = array<i64: 1, 32>}, {pipeline_mode = #tpu.pipeline_mode<synchronous>, transform_indices = @transform_12, window_bounds = array<i64: 1, 32, 64>}, {pipeline_mode = #tpu.pipeline_mode<synchronous>, transform_indices = @transform_13, window_bounds = array<i64: 1, 1, 64>}, {pipeline_mode = #tpu.pipeline_mode<synchronous>, transform_indices = @transform_14, window_bounds = array<i64: 1, 64, 32>}, {pipeline_mode = #tpu.pipeline_mode<synchronous>, transform_indices = @transform_15, window_bounds = array<i64: 1, 32>}, {pipeline_mode = #tpu.pipeline_mode<synchronous>, transform_indices = @transform_16, window_bounds = array<i64: 1, 32>}, {pipeline_mode = #tpu.pipeline_mode<synchronous>, transform_indices = @transform_17, window_bounds = array<i64: 1, 32>}, {transform_indices = @transform_18, window_bounds = array<i64: 1, 8, 32>}]} {
    %c0_i32 = arith.constant 0 : i32
    %0 = arith.cmpi eq, %arg1, %c0_i32 : i32
    %1 = arith.extui %0 : i1 to i32
    %c0_i32_0 = arith.constant 0 : i32
    %2 = arith.cmpi ne, %1, %c0_i32_0 : i32
    scf.if %2 {
      %c0_65 = arith.constant 0 : index
      %c0_66 = arith.constant 0 : index
      %c0_67 = arith.constant 0 : index
      %142 = vector.load %arg2[%c0_65, %c0_66, %c0_67] : memref<1x8x32xf32, #tpu.memory_space<vmem>>, vector<1x8x32xf32>
      %143 = vector.shape_cast %142 : vector<1x8x32xf32> to vector<8x32xf32>
      %c0_68 = arith.constant 0 : index
      %c0_69 = arith.constant 0 : index
      %144 = vector.load %arg12[%c0_68, %c0_69] : memref<1x32xf32, #tpu.memory_space<vmem>>, vector<1x32xf32>
      %c0_70 = arith.constant 0 : index
      %c0_71 = arith.constant 0 : index
      %145 = vector.load %arg13[%c0_70, %c0_71] : memref<1x32xf32, #tpu.memory_space<vmem>>, vector<1x32xf32>
      %cst_72 = arith.constant dense<0.000000e+00> : vector<8xf32>
      %146 = vector.multi_reduction <add>, %143, %cst_72 [1] : vector<8x32xf32> to vector<8xf32>
      %147 = vector.shape_cast %146 : vector<8xf32> to vector<8x1xf32>
      %cst_73 = arith.constant 3.200000e+01 : f32
      %148 = vector.broadcast %cst_73 : f32 to vector<8x1xf32>
      %149 = arith.divf %147, %148 : vector<8x1xf32>
      %150 = vector.broadcast %149 : vector<8x1xf32> to vector<8x32xf32>
      %151 = arith.subf %143, %150 : vector<8x32xf32>
      %152 = arith.mulf %151, %151 : vector<8x32xf32>
      %cst_74 = arith.constant dense<0.000000e+00> : vector<8xf32>
      %153 = vector.multi_reduction <add>, %152, %cst_74 [1] : vector<8x32xf32> to vector<8xf32>
      %154 = vector.shape_cast %153 : vector<8xf32> to vector<8x1xf32>
      %cst_75 = arith.constant 0.0322580636 : f32
      %155 = vector.broadcast %cst_75 : f32 to vector<8x1xf32>
      %156 = arith.mulf %154, %155 : vector<8x1xf32>
      %157 = math.sqrt %156 : vector<8x1xf32>
      %cst_76 = arith.constant 9.99999997E-7 : f32
      %158 = vector.broadcast %cst_76 : f32 to vector<8x1xf32>
      %159 = arith.addf %157, %158 : vector<8x1xf32>
      %160 = tpu.reciprocal %159 {approx = true} : vector<8x1xf32> -> vector<8x1xf32>
      %161 = vector.broadcast %149 : vector<8x1xf32> to vector<8x32xf32>
      %162 = arith.subf %143, %161 : vector<8x32xf32>
      %163 = vector.broadcast %144 : vector<1x32xf32> to vector<8x32xf32>
      %164 = arith.mulf %163, %162 : vector<8x32xf32>
      %165 = vector.broadcast %160 : vector<8x1xf32> to vector<8x32xf32>
      %166 = arith.mulf %164, %165 : vector<8x32xf32>
      %167 = vector.broadcast %145 : vector<1x32xf32> to vector<8x32xf32>
      %168 = arith.addf %166, %167 : vector<8x32xf32>
      %169 = arith.truncf %168 : vector<8x32xf32> to vector<8x32xbf16>
      %c0_77 = arith.constant 0 : index
      %c0_78 = arith.constant 0 : index
      %170 = vector.load %arg6[%c0_77, %c0_78] : memref<32x32xbf16, #tpu.memory_space<vmem>>, vector<32x32xbf16>
      %cst_79 = arith.constant dense<0.000000e+00> : vector<8x32xf32>
      %171 = tpu.matmul %169, %170, %cst_79 {dimension_numbers = #tpu.dot_dimension_numbers<[1], [0], [0], [1], [0, 0, 1, 1], [], []>} : vector<8x32xbf16>, vector<32x32xbf16>, vector<8x32xf32> -> vector<8x32xf32>
      %c0_80 = arith.constant 0 : index
      %c0_81 = arith.constant 0 : index
      %172 = vector.load %arg7[%c0_80, %c0_81] : memref<1x32xf32, #tpu.memory_space<vmem>>, vector<1x32xf32>
      %173 = vector.broadcast %172 : vector<1x32xf32> to vector<8x32xf32>
      %174 = arith.addf %171, %173 : vector<8x32xf32>
      %175 = arith.truncf %174 : vector<8x32xf32> to vector<8x32xbf16>
      %c0_82 = arith.constant 0 : index
      %c0_83 = arith.constant 0 : index
      %176 = vector.load %arg8[%c0_82, %c0_83] : memref<32x32xbf16, #tpu.memory_space<vmem>>, vector<32x32xbf16>
      %cst_84 = arith.constant dense<0.000000e+00> : vector<8x32xf32>
      %177 = tpu.matmul %169, %176, %cst_84 {dimension_numbers = #tpu.dot_dimension_numbers<[1], [0], [0], [1], [0, 0, 1, 1], [], []>} : vector<8x32xbf16>, vector<32x32xbf16>, vector<8x32xf32> -> vector<8x32xf32>
      %c0_85 = arith.constant 0 : index
      %c0_86 = arith.constant 0 : index
      %178 = vector.load %arg9[%c0_85, %c0_86] : memref<1x32xf32, #tpu.memory_space<vmem>>, vector<1x32xf32>
      %179 = vector.broadcast %178 : vector<1x32xf32> to vector<8x32xf32>
      %180 = arith.addf %177, %179 : vector<8x32xf32>
      %181 = arith.truncf %180 : vector<8x32xf32> to vector<8x32xbf16>
      %182 = vector.shape_cast %175 : vector<8x32xbf16> to vector<1x8x4x8xbf16>
      %183 = tpu.transpose %182, [0, 2, 1, 3] : vector<1x8x4x8xbf16> -> vector<1x4x8x8xbf16>
      %c0_87 = arith.constant 0 : index
      %c0_88 = arith.constant 0 : index
      %c0_89 = arith.constant 0 : index
      %c0_90 = arith.constant 0 : index
      %184 = vector.load %arg21[%c0_87, %c0_88, %c0_89, %c0_90] : memref<1x4x8x8xbf16, #tpu.memory_space<vmem>>, vector<1x4x8x8xbf16>
      tpu.vector_store %arg21[%c0_87, %c0_88, %c0_89, %c0_90], %183 {strides = array<i32>} : memref<1x4x8x8xbf16, #tpu.memory_space<vmem>>, vector<1x4x8x8xbf16>,
      %185 = vector.shape_cast %181 : vector<8x32xbf16> to vector<1x8x4x8xbf16>
      %186 = tpu.transpose %185, [0, 2, 1, 3] : vector<1x8x4x8xbf16> -> vector<1x4x8x8xbf16>
      %c0_91 = arith.constant 0 : index
      %c0_92 = arith.constant 0 : index
      %c0_93 = arith.constant 0 : index
      %c0_94 = arith.constant 0 : index
      %187 = vector.load %arg22[%c0_91, %c0_92, %c0_93, %c0_94] : memref<1x4x8x8xbf16, #tpu.memory_space<vmem>>, vector<1x4x8x8xbf16>
      tpu.vector_store %arg22[%c0_91, %c0_92, %c0_93, %c0_94], %186 {strides = array<i32>} : memref<1x4x8x8xbf16, #tpu.memory_space<vmem>>, vector<1x4x8x8xbf16>,
    } else {
    }
    %c8_i32 = arith.constant 8 : i32
    %3 = arith.muli %arg1, %c8_i32 : i32
    %4 = tpu.assume_multiple %3, 8 : i32
    %c0 = arith.constant 0 : index
    %5 = arith.index_cast %4 : i32 to index
    %c0_1 = arith.constant 0 : index
    %6 = vector.load %arg2[%c0, %5, %c0_1] : memref<1x8x32xf32, #tpu.memory_space<vmem>>, vector<1x8x32xf32>
    %7 = vector.shape_cast %6 : vector<1x8x32xf32> to vector<8x32xf32>
    %c0_2 = arith.constant 0 : index
    %c0_3 = arith.constant 0 : index
    %8 = vector.load %arg12[%c0_2, %c0_3] : memref<1x32xf32, #tpu.memory_space<vmem>>, vector<1x32xf32>
    %c0_4 = arith.constant 0 : index
    %c0_5 = arith.constant 0 : index
    %9 = vector.load %arg13[%c0_4, %c0_5] : memref<1x32xf32, #tpu.memory_space<vmem>>, vector<1x32xf32>
    %cst = arith.constant dense<0.000000e+00> : vector<8xf32>
    %10 = vector.multi_reduction <add>, %7, %cst [1] : vector<8x32xf32> to vector<8xf32>
    %11 = vector.shape_cast %10 : vector<8xf32> to vector<8x1xf32>
    %cst_6 = arith.constant 3.200000e+01 : f32
    %12 = vector.broadcast %cst_6 : f32 to vector<8x1xf32>
    %13 = arith.divf %11, %12 : vector<8x1xf32>
    %14 = vector.broadcast %13 : vector<8x1xf32> to vector<8x32xf32>
    %15 = arith.subf %7, %14 : vector<8x32xf32>
    %16 = arith.mulf %15, %15 : vector<8x32xf32>
    %cst_7 = arith.constant dense<0.000000e+00> : vector<8xf32>
    %17 = vector.multi_reduction <add>, %16, %cst_7 [1] : vector<8x32xf32> to vector<8xf32>
    %18 = vector.shape_cast %17 : vector<8xf32> to vector<8x1xf32>
    %cst_8 = arith.constant 0.0322580636 : f32
    %19 = vector.broadcast %cst_8 : f32 to vector<8x1xf32>
    %20 = arith.mulf %18, %19 : vector<8x1xf32>
    %21 = math.sqrt %20 : vector<8x1xf32>
    %cst_9 = arith.constant 9.99999997E-7 : f32
    %22 = vector.broadcast %cst_9 : f32 to vector<8x1xf32>
    %23 = arith.addf %21, %22 : vector<8x1xf32>
    %24 = tpu.reciprocal %23 {approx = true} : vector<8x1xf32> -> vector<8x1xf32>
    %25 = vector.broadcast %13 : vector<8x1xf32> to vector<8x32xf32>
    %26 = arith.subf %7, %25 : vector<8x32xf32>
    %27 = vector.broadcast %8 : vector<1x32xf32> to vector<8x32xf32>
    %28 = arith.mulf %27, %26 : vector<8x32xf32>
    %29 = vector.broadcast %24 : vector<8x1xf32> to vector<8x32xf32>
    %30 = arith.mulf %28, %29 : vector<8x32xf32>
    %31 = vector.broadcast %9 : vector<1x32xf32> to vector<8x32xf32>
    %32 = arith.addf %30, %31 : vector<8x32xf32>
    %33 = arith.truncf %32 : vector<8x32xf32> to vector<8x32xbf16>
    %c0_10 = arith.constant 0 : index
    %c0_11 = arith.constant 0 : index
    %34 = vector.load %arg4[%c0_10, %c0_11] : memref<32x32xbf16, #tpu.memory_space<vmem>>, vector<32x32xbf16>
    %cst_12 = arith.constant dense<0.000000e+00> : vector<8x32xf32>
    %35 = tpu.matmul %33, %34, %cst_12 {dimension_numbers = #tpu.dot_dimension_numbers<[1], [0], [0], [1], [0, 0, 1, 1], [], []>} : vector<8x32xbf16>, vector<32x32xbf16>, vector<8x32xf32> -> vector<8x32xf32>
    %c0_13 = arith.constant 0 : index
    %c0_14 = arith.constant 0 : index
    %36 = vector.load %arg5[%c0_13, %c0_14] : memref<1x32xf32, #tpu.memory_space<vmem>>, vector<1x32xf32>
    %37 = vector.broadcast %36 : vector<1x32xf32> to vector<8x32xf32>
    %38 = arith.addf %35, %37 : vector<8x32xf32>
    %39 = arith.truncf %38 : vector<8x32xf32> to vector<8x32xbf16>
    %40 = vector.shape_cast %39 : vector<8x32xbf16> to vector<8x4x8xbf16>
    %41 = tpu.transpose %40, [1, 0, 2] : vector<8x4x8xbf16> -> vector<4x8x8xbf16>
    %cst_15 = arith.constant 0xFF800000 : f32
    %42 = vector.broadcast %cst_15 : f32 to vector<4x8x1xf32>
    %cst_16 = arith.constant 0.000000e+00 : f32
    %43 = vector.broadcast %cst_16 : f32 to vector<4x8x1xf32>
    %cst_17 = arith.constant 0.000000e+00 : f32
    %44 = vector.broadcast %cst_17 : f32 to vector<4x8x8xf32>
    %c0_i32_18 = arith.constant 0 : i32
    %45 = arith.index_cast %c0_i32_18 : i32 to index
    %c0_19 = arith.constant 0 : index
    %c0_20 = arith.constant 0 : index
    %c0_21 = arith.constant 0 : index
    %46 = vector.load %arg21[%45, %c0_19, %c0_20, %c0_21] : memref<1x4x8x8xbf16, #tpu.memory_space<vmem>>, vector<1x4x8x8xbf16>
    %47 = vector.shape_cast %46 : vector<1x4x8x8xbf16> to vector<4x8x8xbf16>
    %48 = arith.index_cast %c0_i32_18 : i32 to index
    %c0_22 = arith.constant 0 : index
    %c0_23 = arith.constant 0 : index
    %c0_24 = arith.constant 0 : index
    %49 = vector.load %arg22[%48, %c0_22, %c0_23, %c0_24] : memref<1x4x8x8xbf16, #tpu.memory_space<vmem>>, vector<1x4x8x8xbf16>
    %50 = vector.shape_cast %49 : vector<1x4x8x8xbf16> to vector<4x8x8xbf16>
    %c0_25 = arith.constant 0 : index
    %51 = arith.index_cast %c0_i32_18 : i32 to index
    %c0_26 = arith.constant 0 : index
    %c0_27 = arith.constant 0 : index
    %52 = vector.load %arg3[%c0_25, %51, %c0_26, %c0_27] : memref<1x1x1x8xf32, #tpu.memory_space<vmem>>, vector<1x1x1x8xf32>
    %53 = vector.shape_cast %52 : vector<1x1x1x8xf32> to vector<1x8xf32>
    "tpu.trace_start"() <{level = 10 : i32, message = "hqd,hkd->hqk"}> : () -> ()
    %cst_28 = arith.constant dense<0.000000e+00> : vector<4x8x8xf32>
    %54 = tpu.matmul %41, %47, %cst_28 {dimension_numbers = #tpu.dot_dimension_numbers<[2], [2], [1], [1], [0, 0, 0, 1, 1, 1], [0], [0]>} : vector<4x8x8xbf16>, vector<4x8x8xbf16>, vector<4x8x8xf32> -> vector<4x8x8xf32>
    "tpu.trace_stop"() : () -> ()
    %cst_29 = arith.constant 1.000000e+00 : f32
    %55 = vector.broadcast %cst_29 : f32 to vector<1x8xf32>
    %56 = arith.subf %53, %55 : vector<1x8xf32>
    %cst_30 = arith.constant 1.000000e+09 : f32
    %57 = vector.broadcast %cst_30 : f32 to vector<1x8xf32>
    %58 = arith.mulf %56, %57 : vector<1x8xf32>
    %59 = vector.shape_cast %58 : vector<1x8xf32> to vector<1x1x8xf32>
    %60 = vector.broadcast %59 : vector<1x1x8xf32> to vector<4x8x8xf32>
    %61 = arith.addf %54, %60 : vector<4x8x8xf32>
    %cst_31 = arith.constant dense<0xFF800000> : vector<4x8xf32>
    %62 = vector.multi_reduction <maximumf>, %61, %cst_31 [2] : vector<4x8x8xf32> to vector<4x8xf32>
    %63 = vector.shape_cast %62 : vector<4x8xf32> to vector<4x8x1xf32>
    %64 = arith.maximumf %42, %63 : vector<4x8x1xf32>
    %65 = arith.subf %42, %64 : vector<4x8x1xf32>
    %66 = math.exp %65 : vector<4x8x1xf32>
    %67 = vector.broadcast %64 : vector<4x8x1xf32> to vector<4x8x8xf32>
    %68 = arith.subf %61, %67 : vector<4x8x8xf32>
    %69 = math.exp %68 : vector<4x8x8xf32>
    %70 = arith.mulf %66, %43 : vector<4x8x1xf32>
    %cst_32 = arith.constant dense<0.000000e+00> : vector<4x8xf32>
    %71 = vector.multi_reduction <add>, %69, %cst_32 [2] : vector<4x8x8xf32> to vector<4x8xf32>
    %72 = vector.shape_cast %71 : vector<4x8xf32> to vector<4x8x1xf32>
    %73 = arith.addf %70, %72 : vector<4x8x1xf32>
    %74 = vector.broadcast %66 : vector<4x8x1xf32> to vector<4x8x8xf32>
    %75 = arith.mulf %74, %44 : vector<4x8x8xf32>
    %76 = arith.truncf %69 : vector<4x8x8xf32> to vector<4x8x8xbf16>
    "tpu.trace_start"() <{level = 10 : i32, message = "hqk,hkd->hqd"}> : () -> ()
    %cst_33 = arith.constant dense<0.000000e+00> : vector<4x8x8xf32>
    %77 = tpu.matmul %76, %50, %cst_33 {dimension_numbers = #tpu.dot_dimension_numbers<[2], [1], [1], [2], [0, 0, 0, 1, 1, 2], [0], [0]>} : vector<4x8x8xbf16>, vector<4x8x8xbf16>, vector<4x8x8xf32> -> vector<4x8x8xf32>
    "tpu.trace_stop"() : () -> ()
    %78 = arith.addf %75, %77 : vector<4x8x8xf32>
    %c1_i32 = arith.constant 1 : i32
    %79 = tpu.reciprocal %73 {approx = true} : vector<4x8x1xf32> -> vector<4x8x1xf32>
    %80 = vector.broadcast %79 : vector<4x8x1xf32> to vector<4x8x8xf32>
    %81 = arith.mulf %78, %80 : vector<4x8x8xf32>
    %82 = arith.truncf %81 : vector<4x8x8xf32> to vector<4x8x8xbf16>
    %83 = tpu.transpose %82, [1, 0, 2] : vector<4x8x8xbf16> -> vector<8x4x8xbf16>
    %84 = vector.shape_cast %83 : vector<8x4x8xbf16> to vector<8x32xbf16>
    %c0_34 = arith.constant 0 : index
    %c0_35 = arith.constant 0 : index
    %85 = vector.load %arg10[%c0_34, %c0_35] : memref<32x32xbf16, #tpu.memory_space<vmem>>, vector<32x32xbf16>
    %cst_36 = arith.constant dense<0.000000e+00> : vector<8x32xf32>
    %86 = tpu.matmul %84, %85, %cst_36 {dimension_numbers = #tpu.dot_dimension_numbers<[1], [0], [0], [1], [0, 0, 1, 1], [], []>} : vector<8x32xbf16>, vector<32x32xbf16>, vector<8x32xf32> -> vector<8x32xf32>
    %c0_37 = arith.constant 0 : index
    %c0_38 = arith.constant 0 : index
    %87 = vector.load %arg11[%c0_37, %c0_38] : memref<1x32xf32, #tpu.memory_space<vmem>>, vector<1x32xf32>
    %88 = vector.broadcast %87 : vector<1x32xf32> to vector<8x32xf32>
    %89 = arith.addf %86, %88 : vector<8x32xf32>
    %90 = arith.addf %7, %89 : vector<8x32xf32>
    %c0_39 = arith.constant 0 : index
    %c0_40 = arith.constant 0 : index
    %91 = vector.load %arg18[%c0_39, %c0_40] : memref<1x32xf32, #tpu.memory_space<vmem>>, vector<1x32xf32>
    %c0_41 = arith.constant 0 : index
    %c0_42 = arith.constant 0 : index
    %92 = vector.load %arg19[%c0_41, %c0_42] : memref<1x32xf32, #tpu.memory_space<vmem>>, vector<1x32xf32>
    %cst_43 = arith.constant dense<0.000000e+00> : vector<8xf32>
    %93 = vector.multi_reduction <add>, %90, %cst_43 [1] : vector<8x32xf32> to vector<8xf32>
    %94 = vector.shape_cast %93 : vector<8xf32> to vector<8x1xf32>
    %cst_44 = arith.constant 3.200000e+01 : f32
    %95 = vector.broadcast %cst_44 : f32 to vector<8x1xf32>
    %96 = arith.divf %94, %95 : vector<8x1xf32>
    %97 = vector.broadcast %96 : vector<8x1xf32> to vector<8x32xf32>
    %98 = arith.subf %90, %97 : vector<8x32xf32>
    %99 = arith.mulf %98, %98 : vector<8x32xf32>
    %cst_45 = arith.constant dense<0.000000e+00> : vector<8xf32>
    %100 = vector.multi_reduction <add>, %99, %cst_45 [1] : vector<8x32xf32> to vector<8xf32>
    %101 = vector.shape_cast %100 : vector<8xf32> to vector<8x1xf32>
    %cst_46 = arith.constant 0.0322580636 : f32
    %102 = vector.broadcast %cst_46 : f32 to vector<8x1xf32>
    %103 = arith.mulf %101, %102 : vector<8x1xf32>
    %104 = math.sqrt %103 : vector<8x1xf32>
    %cst_47 = arith.constant 9.99999997E-7 : f32
    %105 = vector.broadcast %cst_47 : f32 to vector<8x1xf32>
    %106 = arith.addf %104, %105 : vector<8x1xf32>
    %107 = tpu.reciprocal %106 {approx = true} : vector<8x1xf32> -> vector<8x1xf32>
    %108 = vector.broadcast %96 : vector<8x1xf32> to vector<8x32xf32>
    %109 = arith.subf %90, %108 : vector<8x32xf32>
    %110 = vector.broadcast %91 : vector<1x32xf32> to vector<8x32xf32>
    %111 = arith.mulf %110, %109 : vector<8x32xf32>
    %112 = vector.broadcast %107 : vector<8x1xf32> to vector<8x32xf32>
    %113 = arith.mulf %111, %112 : vector<8x32xf32>
    %114 = vector.broadcast %92 : vector<1x32xf32> to vector<8x32xf32>
    %115 = arith.addf %113, %114 : vector<8x32xf32>
    %116 = arith.truncf %115 : vector<8x32xf32> to vector<8x32xbf16>
    %cst_48 = arith.constant 0.000000e+00 : f32
    %117 = vector.broadcast %cst_48 : f32 to vector<8x32xf32>
    %c0_49 = arith.constant 0 : index
    %c0_50 = arith.constant 0 : index
    %118 = vector.load %arg17[%c0_49, %c0_50] : memref<1x32xf32, #tpu.memory_space<vmem>>, vector<1x32xf32>
    %119 = vector.broadcast %118 : vector<1x32xf32> to vector<8x32xf32>
    %120 = arith.addf %117, %119 : vector<8x32xf32>
    %c0_i32_51 = arith.constant 0 : i32
    %121 = arith.index_cast %c0_i32_51 : i32 to index
    %c0_52 = arith.constant 0 : index
    %c0_53 = arith.constant 0 : index
    %122 = vector.load %arg14[%121, %c0_52, %c0_53] : memref<1x32x64xbf16, #tpu.memory_space<vmem>>, vector<1x32x64xbf16>
    %123 = vector.shape_cast %122 : vector<1x32x64xbf16> to vector<32x64xbf16>
    %cst_54 = arith.constant dense<0.000000e+00> : vector<8x64xf32>
    %124 = tpu.matmul %116, %123, %cst_54 {dimension_numbers = #tpu.dot_dimension_numbers<[1], [0], [0], [1], [0, 0, 1, 1], [], []>} : vector<8x32xbf16>, vector<32x64xbf16>, vector<8x64xf32> -> vector<8x64xf32>
    %125 = arith.index_cast %c0_i32_51 : i32 to index
    %c0_55 = arith.constant 0 : index
    %c0_56 = arith.constant 0 : index
    %126 = vector.load %arg15[%125, %c0_55, %c0_56] : memref<1x1x64xf32, #tpu.memory_space<vmem>>, vector<1x1x64xf32>
    %127 = vector.shape_cast %126 : vector<1x1x64xf32> to vector<1x64xf32>
    %128 = vector.broadcast %127 : vector<1x64xf32> to vector<8x64xf32>
    %129 = arith.addf %124, %128 : vector<8x64xf32>
    %cst_57 = arith.constant 0.000000e+00 : f32
    %130 = vector.broadcast %cst_57 : f32 to vector<8x64xf32>
    %131 = arith.maximumf %129, %130 : vector<8x64xf32>
    %132 = arith.truncf %131 : vector<8x64xf32> to vector<8x64xbf16>
    %133 = arith.index_cast %c0_i32_51 : i32 to index
    %c0_58 = arith.constant 0 : index
    %c0_59 = arith.constant 0 : index
    %134 = vector.load %arg16[%133, %c0_58, %c0_59] : memref<1x64x32xbf16, #tpu.memory_space<vmem>>, vector<1x64x32xbf16>
    %135 = vector.shape_cast %134 : vector<1x64x32xbf16> to vector<64x32xbf16>
    %cst_60 = arith.constant dense<0.000000e+00> : vector<8x32xf32>
    %136 = tpu.matmul %132, %135, %cst_60 {dimension_numbers = #tpu.dot_dimension_numbers<[1], [0], [0], [1], [0, 0, 1, 1], [], []>} : vector<8x64xbf16>, vector<64x32xbf16>, vector<8x32xf32> -> vector<8x32xf32>
    %137 = arith.addf %120, %136 : vector<8x32xf32>
    %c1_i32_61 = arith.constant 1 : i32
    %138 = arith.addf %90, %137 : vector<8x32xf32>
    %c0_62 = arith.constant 0 : index
    %c0_63 = arith.constant 0 : index
    %c0_64 = arith.constant 0 : index
    %139 = vector.load %arg20[%c0_62, %c0_63, %c0_64] : memref<1x8x32xf32, #tpu.memory_space<vmem>>, vector<1x8x32xf32>
    %140 = vector.shape_cast %139 : vector<1x8x32xf32> to vector<8x32xf32>
    %141 = vector.shape_cast %138 : vector<8x32xf32> to vector<1x8x32xf32>
    tpu.vector_store %arg20[%c0_62, %c0_63, %c0_64], %141 {strides = array<i32>} : memref<1x8x32xf32, #tpu.memory_space<vmem>>, vector<1x8x32xf32>,
    return
  }
  func.func @transform_0(%arg0: i32, %arg1: i32) -> (i32, i32, i32) {
    %c0_i32 = arith.constant 0 : i32
    %c0_i32_0 = arith.constant 0 : i32
    %c0_i32_1 = arith.constant 0 : i32
    return %arg0, %c0_i32, %c0_i32_0 : i32, i32, i32
  }
  func.func @transform_1(%arg0: i32, %arg1: i32) -> (i32, i32, i32, i32) {
    %c0_i32 = arith.constant 0 : i32
    %c0_i32_0 = arith.constant 0 : i32
    %c0_i32_1 = arith.constant 0 : i32
    %c0_i32_2 = arith.constant 0 : i32
    return %arg0, %c0_i32, %c0_i32_0, %c0_i32_1 : i32, i32, i32, i32
  }
  func.func @transform_2(%arg0: i32, %arg1: i32) -> (i32, i32) {
    %c0_i32 = arith.constant 0 : i32
    %c0_i32_0 = arith.constant 0 : i32
    %c0_i32_1 = arith.constant 0 : i32
    return %c0_i32, %c0_i32_0 : i32, i32
  }
  func.func @transform_3(%arg0: i32, %arg1: i32) -> (i32, i32) {
    %c0_i32 = arith.constant 0 : i32
    %c0_i32_0 = arith.constant 0 : i32
    %c0_i32_1 = arith.constant 0 : i32
    return %c0_i32, %c0_i32_0 : i32, i32
  }
  func.func @transform_4(%arg0: i32, %arg1: i32) -> (i32, i32) {
    %c0_i32 = arith.constant 0 : i32
    %c0_i32_0 = arith.constant 0 : i32
    %c0_i32_1 = arith.constant 0 : i32
    return %c0_i32, %c0_i32_0 : i32, i32
  }
  func.func @transform_5(%arg0: i32, %arg1: i32) -> (i32, i32) {
    %c0_i32 = arith.constant 0 : i32
    %c0_i32_0 = arith.constant 0 : i32
    %c0_i32_1 = arith.constant 0 : i32
    return %c0_i32, %c0_i32_0 : i32, i32
  }
  func.func @transform_6(%arg0: i32, %arg1: i32) -> (i32, i32) {
    %c0_i32 = arith.constant 0 : i32
    %c0_i32_0 = arith.constant 0 : i32
    %c0_i32_1 = arith.constant 0 : i32
    return %c0_i32, %c0_i32_0 : i32, i32
  }
  func.func @transform_7(%arg0: i32, %arg1: i32) -> (i32, i32) {
    %c0_i32 = arith.constant 0 : i32
    %c0_i32_0 = arith.constant 0 : i32
    %c0_i32_1 = arith.constant 0 : i32
    return %c0_i32, %c0_i32_0 : i32, i32
  }
  func.func @transform_8(%arg0: i32, %arg1: i32) -> (i32, i32) {
    %c0_i32 = arith.constant 0 : i32
    %c0_i32_0 = arith.constant 0 : i32
    %c0_i32_1 = arith.constant 0 : i32
    return %c0_i32, %c0_i32_0 : i32, i32
  }
  func.func @transform_9(%arg0: i32, %arg1: i32) -> (i32, i32) {
    %c0_i32 = arith.constant 0 : i32
    %c0_i32_0 = arith.constant 0 : i32
    %c0_i32_1 = arith.constant 0 : i32
    return %c0_i32, %c0_i32_0 : i32, i32
  }
  func.func @transform_10(%arg0: i32, %arg1: i32) -> (i32, i32) {
    %c0_i32 = arith.constant 0 : i32
    %c0_i32_0 = arith.constant 0 : i32
    %c0_i32_1 = arith.constant 0 : i32
    return %c0_i32, %c0_i32_0 : i32, i32
  }
  func.func @transform_11(%arg0: i32, %arg1: i32) -> (i32, i32) {
    %c0_i32 = arith.constant 0 : i32
    %c0_i32_0 = arith.constant 0 : i32
    %c0_i32_1 = arith.constant 0 : i32
    return %c0_i32, %c0_i32_0 : i32, i32
  }
  func.func @transform_12(%arg0: i32, %arg1: i32) -> (i32, i32, i32) {
    %c0_i32 = arith.constant 0 : i32
    %c0_i32_0 = arith.constant 0 : i32
    %c0_i32_1 = arith.constant 0 : i32
    %c0_i32_2 = arith.constant 0 : i32
    return %c0_i32, %c0_i32_0, %c0_i32_1 : i32, i32, i32
  }
  func.func @transform_13(%arg0: i32, %arg1: i32) -> (i32, i32, i32) {
    %c0_i32 = arith.constant 0 : i32
    %c0_i32_0 = arith.constant 0 : i32
    %c0_i32_1 = arith.constant 0 : i32
    %c0_i32_2 = arith.constant 0 : i32
    return %c0_i32, %c0_i32_0, %c0_i32_1 : i32, i32, i32
  }
  func.func @transform_14(%arg0: i32, %arg1: i32) -> (i32, i32, i32) {
    %c0_i32 = arith.constant 0 : i32
    %c0_i32_0 = arith.constant 0 : i32
    %c0_i32_1 = arith.constant 0 : i32
    %c0_i32_2 = arith.constant 0 : i32
    return %c0_i32, %c0_i32_0, %c0_i32_1 : i32, i32, i32
  }
  func.func @transform_15(%arg0: i32, %arg1: i32) -> (i32, i32) {
    %c0_i32 = arith.constant 0 : i32
    %c0_i32_0 = arith.constant 0 : i32
    %c0_i32_1 = arith.constant 0 : i32
    return %c0_i32, %c0_i32_0 : i32, i32
  }
  func.func @transform_16(%arg0: i32, %arg1: i32) -> (i32, i32) {
    %c0_i32 = arith.constant 0 : i32
    %c0_i32_0 = arith.constant 0 : i32
    %c0_i32_1 = arith.constant 0 : i32
    return %c0_i32, %c0_i32_0 : i32, i32
  }
  func.func @transform_17(%arg0: i32, %arg1: i32) -> (i32, i32) {
    %c0_i32 = arith.constant 0 : i32
    %c0_i32_0 = arith.constant 0 : i32
    %c0_i32_1 = arith.constant 0 : i32
    return %c0_i32, %c0_i32_0 : i32, i32
  }
  func.func @transform_18(%arg0: i32, %arg1: i32) -> (i32, i32, i32) {
    %c0_i32 = arith.constant 0 : i32
    %c0_i32_0 = arith.constant 0 : i32
    return %arg0, %arg1, %c0_i32 : i32, i32, i32
  }
}

</mosaic_0001>

<llo_original>
// kernel: tpu_custom_call.1
$region0: #{tpu_custom_call.1}
  #allocation0 [shape = 'u32[]', space=smem, size = 0x4, offset = 0x4, fixed_abs, tag = 'smem constant byte address 0x4 - core index']
  #allocation1 [shape = 'u32[144,128]{1,0:T(1,128)}', space=vmem, size = 0x12000, scoped, tag = 'internal scratch']
  #allocation2 [shape = 'bf16[1,4,8,8]{3,2,1,0:T(8,128)(2,1)}', space=vmem, size = 0x2000, scoped, tag = 'scratch operand']
  #allocation3 [shape = 'bf16[1,4,8,8]{3,2,1,0:T(8,128)(2,1)}', space=vmem, size = 0x2000, scoped, tag = 'scratch operand']
  %s0 = inlined_call_operand.vmem [shape: f32[2,8,32], index: 0, kind: input, shape index: {}]
  %s1 = inlined_call_operand.vmem [shape: f32[2,1,1,8], index: 1, kind: input, shape index: {}]
  %s2 = inlined_call_operand.vmem [shape: bf16[32,32], index: 2, kind: input, shape index: {}]
  %s3 = inlined_call_operand.hbm [shape: f32[1,32], index: 3, kind: input, shape index: {}]
  %s4 = inlined_call_operand.vmem [shape: bf16[32,32], index: 4, kind: input, shape index: {}]
  %s5 = inlined_call_operand.hbm [shape: f32[1,32], index: 5, kind: input, shape index: {}]
  %s6 = inlined_call_operand.hbm [shape: bf16[32,32], index: 6, kind: input, shape index: {}]
  %s7 = inlined_call_operand.hbm [shape: f32[1,32], index: 7, kind: input, shape index: {}]
  %s8 = inlined_call_operand.hbm [shape: bf16[32,32], index: 8, kind: input, shape index: {}]
  %s9 = inlined_call_operand.hbm [shape: f32[1,32], index: 9, kind: input, shape index: {}]
  %s10 = inlined_call_operand.vmem [shape: f32[1,32], index: 10, kind: input, shape index: {}]
  %s11 = inlined_call_operand.vmem [shape: f32[1,32], index: 11, kind: input, shape index: {}]
  %s12 = inlined_call_operand.vmem [shape: bf16[1,32,64], index: 12, kind: input, shape index: {}]
  %s13 = inlined_call_operand.vmem [shape: f32[1,1,64], index: 13, kind: input, shape index: {}]
  %s14 = inlined_call_operand.vmem [shape: bf16[1,64,32], index: 14, kind: input, shape index: {}]
  %s15 = inlined_call_operand.vmem [shape: f32[1,32], index: 15, kind: input, shape index: {}]
  %s16 = inlined_call_operand.vmem [shape: f32[1,32], index: 16, kind: input, shape index: {}]
  %s17 = inlined_call_operand.vmem [shape: f32[1,32], index: 17, kind: input, shape index: {}]
  %s18 = inlined_call_operand.hbm [shape: f32[2,8,32], index: 18, kind: output, shape index: {}]
  %s19 = sld [smem:[#allocation0]]
  $region133: #{tpu_custom_call.1} parent=0
    _
  %s21 = ssub.s32 1, %s19
  %s22 = scalar_select 0, %s21, %s19
  $region1: #{tpu_custom_call.1} parent=0
    #allocation4 [shape = 'u8[512]{0}', space=vmem, size = 0x400, scoped, tag = 'input window, operand 3, single buffered']
    #allocation5 [shape = 's32[2]{0}', space=sflag, size = 0x8, scoped, tag = 'scoped memory for tpu_custom_call.1']
    #allocation6 [shape = 's32[2]{0}', space=sflag, size = 0x8, scoped, tag = 'scoped memory for tpu_custom_call.1']
    #allocation7 [shape = 'u8[512]{0}', space=vmem, size = 0x400, scoped, tag = 'input window, operand 5, single buffered']
    #allocation8 [shape = 's32[1]{0}', space=sflag, size = 0x4, scoped, tag = 'scoped memory for tpu_custom_call.1']
    #allocation9 [shape = 'u8[8192]{0}', space=vmem, size = 0x2000, scoped, tag = 'input window, operand 6, single buffered']
    #allocation10 [shape = 'u8[512]{0}', space=vmem, size = 0x400, scoped, tag = 'input window, operand 7, single buffered']
    #allocation11 [shape = 's32[1]{0}', space=sflag, size = 0x4, scoped, tag = 'scoped memory for tpu_custom_call.1']
    #allocation12 [shape = 'u8[8192]{0}', space=vmem, size = 0x2000, scoped, tag = 'input window, operand 8, single buffered']
    #allocation13 [shape = 'u8[512]{0}', space=vmem, size = 0x400, scoped, tag = 'input window, operand 9, single buffered']
    #allocation14 [shape = 's32[1]{0}', space=sflag, size = 0x4, scoped, tag = 'scoped memory for tpu_custom_call.1']
    #allocation15 [shape = 'u8[8192]{0}', space=vmem, size = 0x2000, scoped, tag = 'output window, operand 0']
    %23 = vsyncpa [#allocation5], 0
    %24 = vsyncpa [#allocation8], 0
    %25 = vsyncpa [#allocation11], 0
    %26 = vsyncpa [#allocation14], 0
    %27 = vsyncpa [#allocation6], 0
    %s28 = scalar_lea.sflag [#allocation6], 1
    %29 = vsyncpa %s28, 0
    loop: start=0, step=1, limit=4
    $region2: #{tpu_custom_call.1} parent=1 // loop_pre_header
      _
    $region3: #{tpu_custom_call.1} parent=1 // loop_header
      %s31 = sphi 0, %s35
      %p32 = scmp.ge.s32.totalorder %s31, 4
      %s38 = sphi 0, %s50
      %s39 = sphi 0, %s46
      %s40 = sphi 0, %s38
      %s41 = sphi 0, %s39
      %s42 = sphi 0, %s40
      %s43 = sphi 0, %s41
      %s53 = sphi 0, %s55
      %s56 = sphi 0, %s53
      %s57 = sphi 0, %s56
      %s73 = sphi 0, %s57
      %s79 = sphi 0, %s81
      %s82 = sphi 0, %s79
      %s83 = sphi 0, %s82
      %s99 = sphi 0, %s83
      %s103 = sphi 0, %s103
      %s105 = sphi 0, %s103
      %s106 = sphi 0, %s105
      %s120 = sphi 0, %s106
      %s124 = sphi 0, %s124
      %s126 = sphi 0, %s124
      %s127 = sphi 0, %s126
      %s141 = sphi 0, %s127
      %s145 = sphi 0, %s145
      %s147 = sphi 0, %s145
      %s148 = sphi 0, %s147
      %s162 = sphi 0, %s148
      %s166 = sphi 0, %s166
      %s168 = sphi 0, %s166
      %s169 = sphi 0, %s168
      %s183 = sphi 0, %s169
      %s187 = sphi 0, %s187
      %s189 = sphi 0, %s187
      %s190 = sphi 0, %s189
      %s204 = sphi 0, %s190
      %s208 = sphi 0, %s208
      %s210 = sphi 0, %s208
      %s211 = sphi 0, %s210
      %s225 = sphi 0, %s211
      %s229 = sphi 0, %s229
      %s231 = sphi 0, %s229
      %s232 = sphi 0, %s231
      %s246 = sphi 0, %s232
      %s250 = sphi 0, %s250
      %s252 = sphi 0, %s250
      %s253 = sphi 0, %s252
      %s267 = sphi 0, %s253
      %s271 = sphi 0, %s271
      %s273 = sphi 0, %s271
      %s274 = sphi 0, %s273
      %s288 = sphi 0, %s274
      %s292 = sphi 0, %s292
      %s294 = sphi 0, %s292
      %s295 = sphi 0, %s294
      %s309 = sphi 0, %s295
      %s313 = sphi 0, %s313
      %s315 = sphi 0, %s313
      %s316 = sphi 0, %s315
      %s330 = sphi 0, %s316
      %s334 = sphi 0, %s334
      %s336 = sphi 0, %s334
      %s337 = sphi 0, %s336
      %s351 = sphi 0, %s337
      %s355 = sphi 0, %s355
      %s357 = sphi 0, %s355
      %s358 = sphi 0, %s357
      %s372 = sphi 0, %s358
      %s376 = sphi 0, %s376
      %s378 = sphi 0, %s376
      %s379 = sphi 0, %s378
      %s393 = sphi 0, %s379
      %s397 = sphi 0, %s397
      %s399 = sphi 0, %s397
      %s400 = sphi 0, %s399
      %s414 = sphi 0, %s400
      %s418 = sphi 0, %s418
      %s420 = sphi 0, %s418
      %s421 = sphi 0, %s420
      %s435 = sphi 0, %s421
      %s443 = sphi 0, %s445
      %s446 = sphi 0, %s443
      %s447 = sphi 0, %s446
      %s463 = sphi 0, %s447
    $region4: #{tpu_custom_call.1} parent=1 // loop_header_branch
      %34 = sbr.rel (%p32) target = $region8
    $region5: #{tpu_custom_call.1} parent=1 // loop_body
      %s36 = ssub.s32 %s31, 1
      %s37 = ssub.s32 %s31, 2
      %s44 = sadd.s32 1, %s39
      %p45 = scmp.ge.s32.totalorder %s44, 1
      %s46 = scalar_select %p45, 0, %s44
      %s47 = sadd.s32 1, %s38
      %s48 = scalar_select %p45, %s47, %s38
      %p49 = scmp.ge.s32.totalorder %s48, 2
      %s50 = scalar_select %p49, 0, %s48
      %s51 = ssub.s32 %s38, %s50
      %p52 = scmp.eq.s32.totalorder %s51, 0
      %s54 = sadd.s32 %s53, 1
      %s55 = scalar_select %p52, %s53, %s54
      %p58 = pneg %p52
      %p59 = scmp.eq.s32.totalorder %s31, 1
      %p60 = por %p58, %p59
      %p61 = scmp.ne.s32.totalorder %s53, %s56
      %p62 = scmp.eq.s32.totalorder %s31, 0
      %p63 = por %p61, %p62
      %p64 = scmp.ne.s32.totalorder %s53, %s56
      %p65 = scmp.eq.s32.totalorder %s36, 1
      %p66 = por %p64, %p65
      %p67 = scmp.ne.s32.totalorder %s56, %s57
      %p68 = scmp.eq.s32.totalorder %s36, 0
      %p69 = por %p67, %p68
      %p70 = scmp.ne.s32.totalorder %s56, %s57
      %p71 = scmp.eq.s32.totalorder %s37, 1
      %p72 = por %p70, %p71
      %p74 = scmp.ne.s32.totalorder %s57, %s73
      %p75 = scmp.eq.s32.totalorder %s37, 0
      %p76 = por %p74, %p75
      %s77 = ssub.s32 %s38, %s50
      %p78 = scmp.eq.s32.totalorder %s77, 0
      %s80 = sadd.s32 %s79, 1
      %s81 = scalar_select %p78, %s79, %s80
      %p84 = pneg %p78
      %p85 = scmp.eq.s32.totalorder %s31, 1
      %p86 = por %p84, %p85
      %p87 = scmp.ne.s32.totalorder %s79, %s82
      %p88 = scmp.eq.s32.totalorder %s31, 0
      %p89 = por %p87, %p88
      %p90 = scmp.ne.s32.totalorder %s79, %s82
      %p91 = scmp.eq.s32.totalorder %s36, 1
      %p92 = por %p90, %p91
      %p93 = scmp.ne.s32.totalorder %s82, %s83
      %p94 = scmp.eq.s32.totalorder %s36, 0
      %p95 = por %p93, %p94
      %p96 = scmp.ne.s32.totalorder %s82, %s83
      %p97 = scmp.eq.s32.totalorder %s37, 1
      %p98 = por %p96, %p97
      %p100 = scmp.ne.s32.totalorder %s83, %s99
      %p101 = scmp.eq.s32.totalorder %s37, 0
      %p102 = por %p100, %p101
      %s104 = sadd.s32 %s103, 1
      %p107 = scmp.eq.s32.totalorder %s31, 1
      %p108 = scmp.ne.s32.totalorder %s103, %s105
      %p109 = scmp.eq.s32.totalorder %s31, 0
      %p110 = por %p108, %p109
      %p111 = scmp.ne.s32.totalorder %s103, %s105
      %p112 = scmp.eq.s32.totalorder %s36, 1
      %p113 = por %p111, %p112
      %p114 = scmp.ne.s32.totalorder %s105, %s106
      %p115 = scmp.eq.s32.totalorder %s36, 0
      %p116 = por %p114, %p115
      %p117 = scmp.ne.s32.totalorder %s105, %s106
      %p118 = scmp.eq.s32.totalorder %s37, 1
      %p119 = por %p117, %p118
      %p121 = scmp.ne.s32.totalorder %s106, %s120
      %p122 = scmp.eq.s32.totalorder %s37, 0
      %p123 = por %p121, %p122
      %s125 = sadd.s32 %s124, 1
      %p128 = scmp.eq.s32.totalorder %s31, 1
      %p129 = scmp.ne.s32.totalorder %s124, %s126
      %p130 = scmp.eq.s32.totalorder %s31, 0
      %p131 = por %p129, %p130
      %p132 = scmp.ne.s32.totalorder %s124, %s126
      %p133 = scmp.eq.s32.totalorder %s36, 1
      %p134 = por %p132, %p133
      %p135 = scmp.ne.s32.totalorder %s126, %s127
      %p136 = scmp.eq.s32.totalorder %s36, 0
      %p137 = por %p135, %p136
      %p138 = scmp.ne.s32.totalorder %s126, %s127
      %p139 = scmp.eq.s32.totalorder %s37, 1
      %p140 = por %p138, %p139
      %p142 = scmp.ne.s32.totalorder %s127, %s141
      %p143 = scmp.eq.s32.totalorder %s37, 0
      %p144 = por %p142, %p143
      %s146 = sadd.s32 %s145, 1
      %p149 = scmp.eq.s32.totalorder %s31, 1
      %p150 = scmp.ne.s32.totalorder %s145, %s147
      %p151 = scmp.eq.s32.totalorder %s31, 0
      %p152 = por %p150, %p151
      %p153 = scmp.ne.s32.totalorder %s145, %s147
      %p154 = scmp.eq.s32.totalorder %s36, 1
      %p155 = por %p153, %p154
      %p156 = scmp.ne.s32.totalorder %s147, %s148
      %p157 = scmp.eq.s32.totalorder %s36, 0
      %p158 = por %p156, %p157
      %p159 = scmp.ne.s32.totalorder %s147, %s148
      %p160 = scmp.eq.s32.totalorder %s37, 1
      %p161 = por %p159, %p160
      %p163 = scmp.ne.s32.totalorder %s148, %s162
      %p164 = scmp.eq.s32.totalorder %s37, 0
      %p165 = por %p163, %p164
      %s167 = sadd.s32 %s166, 1
      %p170 = scmp.eq.s32.totalorder %s31, 1
      %p171 = scmp.ne.s32.totalorder %s166, %s168
      %p172 = scmp.eq.s32.totalorder %s31, 0
      %p173 = por %p171, %p172
      %p174 = scmp.ne.s32.totalorder %s166, %s168
      %p175 = scmp.eq.s32.totalorder %s36, 1
      %p176 = por %p174, %p175
      %p177 = scmp.ne.s32.totalorder %s168, %s169
      %p178 = scmp.eq.s32.totalorder %s36, 0
      %p179 = por %p177, %p178
      %p180 = scmp.ne.s32.totalorder %s168, %s169
      %p181 = scmp.eq.s32.totalorder %s37, 1
      %p182 = por %p180, %p181
      %p184 = scmp.ne.s32.totalorder %s169, %s183
      %p185 = scmp.eq.s32.totalorder %s37, 0
      %p186 = por %p184, %p185
      %s188 = sadd.s32 %s187, 1
      %p191 = scmp.eq.s32.totalorder %s31, 1
      %p192 = scmp.ne.s32.totalorder %s187, %s189
      %p193 = scmp.eq.s32.totalorder %s31, 0
      %p194 = por %p192, %p193
      %p195 = scmp.ne.s32.totalorder %s187, %s189
      %p196 = scmp.eq.s32.totalorder %s36, 1
      %p197 = por %p195, %p196
      %p198 = scmp.ne.s32.totalorder %s189, %s190
      %p199 = scmp.eq.s32.totalorder %s36, 0
      %p200 = por %p198, %p199
      %p201 = scmp.ne.s32.totalorder %s189, %s190
      %p202 = scmp.eq.s32.totalorder %s37, 1
      %p203 = por %p201, %p202
      %p205 = scmp.ne.s32.totalorder %s190, %s204
      %p206 = scmp.eq.s32.totalorder %s37, 0
      %p207 = por %p205, %p206
      %s209 = sadd.s32 %s208, 1
      %p212 = scmp.eq.s32.totalorder %s31, 1
      %p213 = scmp.ne.s32.totalorder %s208, %s210
      %p214 = scmp.eq.s32.totalorder %s31, 0
      %p215 = por %p213, %p214
      %p216 = scmp.ne.s32.totalorder %s208, %s210
      %p217 = scmp.eq.s32.totalorder %s36, 1
      %p218 = por %p216, %p217
      %p219 = scmp.ne.s32.totalorder %s210, %s211
      %p220 = scmp.eq.s32.totalorder %s36, 0
      %p221 = por %p219, %p220
      %p222 = scmp.ne.s32.totalorder %s210, %s211
      %p223 = scmp.eq.s32.totalorder %s37, 1
      %p224 = por %p222, %p223
      %p226 = scmp.ne.s32.totalorder %s211, %s225
      %p227 = scmp.eq.s32.totalorder %s37, 0
      %p228 = por %p226, %p227
      %s230 = sadd.s32 %s229, 1
      %p233 = scmp.eq.s32.totalorder %s31, 1
      %p234 = scmp.ne.s32.totalorder %s229, %s231
      %p235 = scmp.eq.s32.totalorder %s31, 0
      %p236 = por %p234, %p235
      %p237 = scmp.ne.s32.totalorder %s229, %s231
      %p238 = scmp.eq.s32.totalorder %s36, 1
      %p239 = por %p237, %p238
      %p240 = scmp.ne.s32.totalorder %s231, %s232
      %p241 = scmp.eq.s32.totalorder %s36, 0
      %p242 = por %p240, %p241
      %p243 = scmp.ne.s32.totalorder %s231, %s232
      %p244 = scmp.eq.s32.totalorder %s37, 1
      %p245 = por %p243, %p244
      %p247 = scmp.ne.s32.totalorder %s232, %s246
      %p248 = scmp.eq.s32.totalorder %s37, 0
      %p249 = por %p247, %p248
      %s251 = sadd.s32 %s250, 1
      %p254 = scmp.eq.s32.totalorder %s31, 1
      %p255 = scmp.ne.s32.totalorder %s250, %s252
      %p256 = scmp.eq.s32.totalorder %s31, 0
      %p257 = por %p255, %p256
      %p258 = scmp.ne.s32.totalorder %s250, %s252
      %p259 = scmp.eq.s32.totalorder %s36, 1
      %p260 = por %p258, %p259
      %p261 = scmp.ne.s32.totalorder %s252, %s253
      %p262 = scmp.eq.s32.totalorder %s36, 0
      %p263 = por %p261, %p262
      %p264 = scmp.ne.s32.totalorder %s252, %s253
      %p265 = scmp.eq.s32.totalorder %s37, 1
      %p266 = por %p264, %p265
      %p268 = scmp.ne.s32.totalorder %s253, %s267
      %p269 = scmp.eq.s32.totalorder %s37, 0
      %p270 = por %p268, %p269
      %s272 = sadd.s32 %s271, 1
      %p275 = scmp.eq.s32.totalorder %s31, 1
      %p276 = scmp.ne.s32.totalorder %s271, %s273
      %p277 = scmp.eq.s32.totalorder %s31, 0
      %p278 = por %p276, %p277
      %p279 = scmp.ne.s32.totalorder %s271, %s273
      %p280 = scmp.eq.s32.totalorder %s36, 1
      %p281 = por %p279, %p280
      %p282 = scmp.ne.s32.totalorder %s273, %s274
      %p283 = scmp.eq.s32.totalorder %s36, 0
      %p284 = por %p282, %p283
      %p285 = scmp.ne.s32.totalorder %s273, %s274
      %p286 = scmp.eq.s32.totalorder %s37, 1
      %p287 = por %p285, %p286
      %p289 = scmp.ne.s32.totalorder %s274, %s288
      %p290 = scmp.eq.s32.totalorder %s37, 0
      %p291 = por %p289, %p290
      %s293 = sadd.s32 %s292, 1
      %p296 = scmp.eq.s32.totalorder %s31, 1
      %p297 = scmp.ne.s32.totalorder %s292, %s294
      %p298 = scmp.eq.s32.totalorder %s31, 0
      %p299 = por %p297, %p298
      %p300 = scmp.ne.s32.totalorder %s292, %s294
      %p301 = scmp.eq.s32.totalorder %s36, 1
      %p302 = por %p300, %p301
      %p303 = scmp.ne.s32.totalorder %s294, %s295
      %p304 = scmp.eq.s32.totalorder %s36, 0
      %p305 = por %p303, %p304
      %p306 = scmp.ne.s32.totalorder %s294, %s295
      %p307 = scmp.eq.s32.totalorder %s37, 1
      %p308 = por %p306, %p307
      %p310 = scmp.ne.s32.totalorder %s295, %s309
      %p311 = scmp.eq.s32.totalorder %s37, 0
      %p312 = por %p310, %p311
      %s314 = sadd.s32 %s313, 1
      %p317 = scmp.eq.s32.totalorder %s31, 1
      %p318 = scmp.ne.s32.totalorder %s313, %s315
      %p319 = scmp.eq.s32.totalorder %s31, 0
      %p320 = por %p318, %p319
      %p321 = scmp.ne.s32.totalorder %s313, %s315
      %p322 = scmp.eq.s32.totalorder %s36, 1
      %p323 = por %p321, %p322
      %p324 = scmp.ne.s32.totalorder %s315, %s316
      %p325 = scmp.eq.s32.totalorder %s36, 0
      %p326 = por %p324, %p325
      %p327 = scmp.ne.s32.totalorder %s315, %s316
      %p328 = scmp.eq.s32.totalorder %s37, 1
      %p329 = por %p327, %p328
      %p331 = scmp.ne.s32.totalorder %s316, %s330
      %p332 = scmp.eq.s32.totalorder %s37, 0
      %p333 = por %p331, %p332
      %s335 = sadd.s32 %s334, 1
      %p338 = scmp.eq.s32.totalorder %s31, 1
      %p339 = scmp.ne.s32.totalorder %s334, %s336
      %p340 = scmp.eq.s32.totalorder %s31, 0
      %p341 = por %p339, %p340
      %p342 = scmp.ne.s32.totalorder %s334, %s336
      %p343 = scmp.eq.s32.totalorder %s36, 1
      %p344 = por %p342, %p343
      %p345 = scmp.ne.s32.totalorder %s336, %s337
      %p346 = scmp.eq.s32.totalorder %s36, 0
      %p347 = por %p345, %p346
      %p348 = scmp.ne.s32.totalorder %s336, %s337
      %p349 = scmp.eq.s32.totalorder %s37, 1
      %p350 = por %p348, %p349
      %p352 = scmp.ne.s32.totalorder %s337, %s351
      %p353 = scmp.eq.s32.totalorder %s37, 0
      %p354 = por %p352, %p353
      %s356 = sadd.s32 %s355, 1
      %p359 = scmp.eq.s32.totalorder %s31, 1
      %p360 = scmp.ne.s32.totalorder %s355, %s357
      %p361 = scmp.eq.s32.totalorder %s31, 0
      %p362 = por %p360, %p361
      %p363 = scmp.ne.s32.totalorder %s355, %s357
      %p364 = scmp.eq.s32.totalorder %s36, 1
      %p365 = por %p363, %p364
      %p366 = scmp.ne.s32.totalorder %s357, %s358
      %p367 = scmp.eq.s32.totalorder %s36, 0
      %p368 = por %p366, %p367
      %p369 = scmp.ne.s32.totalorder %s357, %s358
      %p370 = scmp.eq.s32.totalorder %s37, 1
      %p371 = por %p369, %p370
      %p373 = scmp.ne.s32.totalorder %s358, %s372
      %p374 = scmp.eq.s32.totalorder %s37, 0
      %p375 = por %p373, %p374
      %s377 = sadd.s32 %s376, 1
      %p380 = scmp.eq.s32.totalorder %s31, 1
      %p381 = scmp.ne.s32.totalorder %s376, %s378
      %p382 = scmp.eq.s32.totalorder %s31, 0
      %p383 = por %p381, %p382
      %p384 = scmp.ne.s32.totalorder %s376, %s378
      %p385 = scmp.eq.s32.totalorder %s36, 1
      %p386 = por %p384, %p385
      %p387 = scmp.ne.s32.totalorder %s378, %s379
      %p388 = scmp.eq.s32.totalorder %s36, 0
      %p389 = por %p387, %p388
      %p390 = scmp.ne.s32.totalorder %s378, %s379
      %p391 = scmp.eq.s32.totalorder %s37, 1
      %p392 = por %p390, %p391
      %p394 = scmp.ne.s32.totalorder %s379, %s393
      %p395 = scmp.eq.s32.totalorder %s37, 0
      %p396 = por %p394, %p395
      %s398 = sadd.s32 %s397, 1
      %p401 = scmp.eq.s32.totalorder %s31, 1
      %p402 = scmp.ne.s32.totalorder %s397, %s399
      %p403 = scmp.eq.s32.totalorder %s31, 0
      %p404 = por %p402, %p403
      %p405 = scmp.ne.s32.totalorder %s397, %s399
      %p406 = scmp.eq.s32.totalorder %s36, 1
      %p407 = por %p405, %p406
      %p408 = scmp.ne.s32.totalorder %s399, %s400
      %p409 = scmp.eq.s32.totalorder %s36, 0
      %p410 = por %p408, %p409
      %p411 = scmp.ne.s32.totalorder %s399, %s400
      %p412 = scmp.eq.s32.totalorder %s37, 1
      %p413 = por %p411, %p412
      %p415 = scmp.ne.s32.totalorder %s400, %s414
      %p416 = scmp.eq.s32.totalorder %s37, 0
      %p417 = por %p415, %p416
      %s419 = sadd.s32 %s418, 1
      %p422 = scmp.eq.s32.totalorder %s31, 1
      %p423 = scmp.ne.s32.totalorder %s418, %s420
      %p424 = scmp.eq.s32.totalorder %s31, 0
      %p425 = por %p423, %p424
      %p426 = scmp.ne.s32.totalorder %s418, %s420
      %p427 = scmp.eq.s32.totalorder %s36, 1
      %p428 = por %p426, %p427
      %p429 = scmp.ne.s32.totalorder %s420, %s421
      %p430 = scmp.eq.s32.totalorder %s36, 0
      %p431 = por %p429, %p430
      %p432 = scmp.ne.s32.totalorder %s420, %s421
      %p433 = scmp.eq.s32.totalorder %s37, 1
      %p434 = por %p432, %p433
      %p436 = scmp.ne.s32.totalorder %s421, %s435
      %p437 = scmp.eq.s32.totalorder %s37, 0
      %p438 = por %p436, %p437
      %s439 = ssub.s32 %s38, %s50
      %s440 = ssub.s32 %s39, %s46
      %s441 = sor.u32 %s439, %s440
      %p442 = scmp.eq.s32.totalorder %s441, 0
      %s444 = sadd.s32 %s443, 1
      %s445 = scalar_select %p442, %s443, %s444
      %p448 = pneg %p442
      %p449 = scmp.eq.s32.totalorder %s31, 1
      %p450 = por %p448, %p449
      %p451 = scmp.ne.s32.totalorder %s443, %s446
      %p452 = scmp.eq.s32.totalorder %s31, 0
      %p453 = por %p451, %p452
      %p454 = scmp.ne.s32.totalorder %s443, %s446
      %p455 = scmp.eq.s32.totalorder %s36, 1
      %p456 = por %p454, %p455
      %p457 = scmp.ne.s32.totalorder %s446, %s447
      %p458 = scmp.eq.s32.totalorder %s36, 0
      %p459 = por %p457, %p458
      %p460 = scmp.ne.s32.totalorder %s446, %s447
      %p461 = scmp.eq.s32.totalorder %s37, 1
      %p462 = por %p460, %p461
      %p464 = scmp.ne.s32.totalorder %s447, %s463
      %p465 = scmp.eq.s32.totalorder %s37, 0
      %p466 = por %p464, %p465
      %p467 = scmp.le.s32.totalorder 1, %s31
      %p468 = scmp.lt.s32.totalorder %s31, 3
      %p469 = pnand %p467, %p468
      %p470 = pneg %p469
      // Predicated region
      $region9: #{tpu_custom_call.1} parent=5 // pred_check
        _
      $region10: #{tpu_custom_call.1} parent=5 // pred_check_branch
        %472 = sbr.rel (%p469) target = $region12
      $region11: #{tpu_custom_call.1} parent=5 // pred_region
        %s473 = ssub.s32 %s31, 1
        // Predicated region
        $region13: #{tpu_custom_call.1} parent=11 // pred_check
          %p474 = pneg %p116
        $region14: #{tpu_custom_call.1} parent=11 // pred_check_branch
          %476 = sbr.rel (%p474) target = $region16
        $region15: #{tpu_custom_call.1} parent=11 // pred_region
          _
        $region16: #{tpu_custom_call.1} parent=11 // pred_fallthru
          _
        // Predicated region
        $region17: #{tpu_custom_call.1} parent=11 // pred_check
          %p477 = pneg %p137
        $region18: #{tpu_custom_call.1} parent=11 // pred_check_branch
          %479 = sbr.rel (%p477) target = $region20
        $region19: #{tpu_custom_call.1} parent=11 // pred_region
          %s481 = ssub.s32 16, 16
          %482 = vsyncadd [#allocation5], %s481
          %s484 = sshll.u32 [#allocation4], 4
          %s485 = int_to_ptr.vmem [resolvable:$true] %s484
          %487 = dma.hbm_to_vmem [thread:$0]  %s3, 16, %s485, [#allocation5]
        $region20: #{tpu_custom_call.1} parent=11 // pred_fallthru
          _
        // Predicated region
        $region21: #{tpu_custom_call.1} parent=11 // pred_check
          %p488 = pneg %p158
        $region22: #{tpu_custom_call.1} parent=11 // pred_check_branch
          %490 = sbr.rel (%p488) target = $region24
        $region23: #{tpu_custom_call.1} parent=11 // pred_region
          _
        $region24: #{tpu_custom_call.1} parent=11 // pred_fallthru
          _
        // Predicated region
        $region25: #{tpu_custom_call.1} parent=11 // pred_check
          %p491 = pneg %p179
        $region26: #{tpu_custom_call.1} parent=11 // pred_check_branch
          %493 = sbr.rel (%p491) target = $region28
        $region27: #{tpu_custom_call.1} parent=11 // pred_region
          %s495 = ssub.s32 16, 16
          %496 = vsyncadd [#allocation8], %s495
          %s498 = sshll.u32 [#allocation7], 4
          %s499 = int_to_ptr.vmem [resolvable:$true] %s498
          %501 = dma.hbm_to_vmem [thread:$0]  %s5, 16, %s499, [#allocation8]
        $region28: #{tpu_custom_call.1} parent=11 // pred_fallthru
          _
        // Predicated region
        $region29: #{tpu_custom_call.1} parent=11 // pred_check
          %p502 = pneg %p200
        $region30: #{tpu_custom_call.1} parent=11 // pred_check_branch
          %504 = sbr.rel (%p502) target = $region32
        $region31: #{tpu_custom_call.1} parent=11 // pred_region
          %s506 = ssub.s32 256, 256
          %507 = vsyncadd [#allocation8], %s506
          %s508 = sshll.u32 [#allocation9], 4
          %s509 = int_to_ptr.vmem [resolvable:$true] %s508
          %514 = dma.hbm_to_vmem [thread:$0]  %s6, 256, %s509, [#allocation8], 64, 64, 4
        $region32: #{tpu_custom_call.1} parent=11 // pred_fallthru
          _
        // Predicated region
        $region33: #{tpu_custom_call.1} parent=11 // pred_check
          %p515 = pneg %p221
        $region34: #{tpu_custom_call.1} parent=11 // pred_check_branch
          %517 = sbr.rel (%p515) target = $region36
        $region35: #{tpu_custom_call.1} parent=11 // pred_region
          %s519 = ssub.s32 16, 16
          %520 = vsyncadd [#allocation11], %s519
          %s522 = sshll.u32 [#allocation10], 4
          %s523 = int_to_ptr.vmem [resolvable:$true] %s522
          %525 = dma.hbm_to_vmem [thread:$0]  %s7, 16, %s523, [#allocation11]
        $region36: #{tpu_custom_call.1} parent=11 // pred_fallthru
          _
        // Predicated region
        $region37: #{tpu_custom_call.1} parent=11 // pred_check
          %p526 = pneg %p242
        $region38: #{tpu_custom_call.1} parent=11 // pred_check_branch
          %528 = sbr.rel (%p526) target = $region40
        $region39: #{tpu_custom_call.1} parent=11 // pred_region
          %s530 = ssub.s32 256, 256
          %531 = vsyncadd [#allocation11], %s530
          %s532 = sshll.u32 [#allocation12], 4
          %s533 = int_to_ptr.vmem [resolvable:$true] %s532
          %538 = dma.hbm_to_vmem [thread:$0]  %s8, 256, %s533, [#allocation11], 64, 64, 4
        $region40: #{tpu_custom_call.1} parent=11 // pred_fallthru
          _
        // Predicated region
        $region41: #{tpu_custom_call.1} parent=11 // pred_check
          %p539 = pneg %p263
        $region42: #{tpu_custom_call.1} parent=11 // pred_check_branch
          %541 = sbr.rel (%p539) target = $region44
        $region43: #{tpu_custom_call.1} parent=11 // pred_region
          %s543 = ssub.s32 16, 16
          %544 = vsyncadd [#allocation14], %s543
          %s546 = sshll.u32 [#allocation13], 4
          %s547 = int_to_ptr.vmem [resolvable:$true] %s546
          %549 = dma.hbm_to_vmem [thread:$0]  %s9, 16, %s547, [#allocation14]
        $region44: #{tpu_custom_call.1} parent=11 // pred_fallthru
          _
        // Predicated region
        $region45: #{tpu_custom_call.1} parent=11 // pred_check
          %p550 = pneg %p284
        $region46: #{tpu_custom_call.1} parent=11 // pred_check_branch
          %552 = sbr.rel (%p550) target = $region48
        $region47: #{tpu_custom_call.1} parent=11 // pred_region
          _
        $region48: #{tpu_custom_call.1} parent=11 // pred_fallthru
          _
        // Predicated region
        $region49: #{tpu_custom_call.1} parent=11 // pred_check
          %p553 = pneg %p305
        $region50: #{tpu_custom_call.1} parent=11 // pred_check_branch
          %555 = sbr.rel (%p553) target = $region52
        $region51: #{tpu_custom_call.1} parent=11 // pred_region
          _
        $region52: #{tpu_custom_call.1} parent=11 // pred_fallthru
          _
        // Predicated region
        $region53: #{tpu_custom_call.1} parent=11 // pred_check
          %p556 = pneg %p326
        $region54: #{tpu_custom_call.1} parent=11 // pred_check_branch
          %558 = sbr.rel (%p556) target = $region56
        $region55: #{tpu_custom_call.1} parent=11 // pred_region
          _
        $region56: #{tpu_custom_call.1} parent=11 // pred_fallthru
          _
        // Predicated region
        $region57: #{tpu_custom_call.1} parent=11 // pred_check
          %p559 = pneg %p347
        $region58: #{tpu_custom_call.1} parent=11 // pred_check_branch
          %561 = sbr.rel (%p559) target = $region60
        $region59: #{tpu_custom_call.1} parent=11 // pred_region
          _
        $region60: #{tpu_custom_call.1} parent=11 // pred_fallthru
          _
        // Predicated region
        $region61: #{tpu_custom_call.1} parent=11 // pred_check
          %p562 = pneg %p368
        $region62: #{tpu_custom_call.1} parent=11 // pred_check_branch
          %564 = sbr.rel (%p562) target = $region64
        $region63: #{tpu_custom_call.1} parent=11 // pred_region
          _
        $region64: #{tpu_custom_call.1} parent=11 // pred_fallthru
          _
        // Predicated region
        $region65: #{tpu_custom_call.1} parent=11 // pred_check
          %p565 = pneg %p389
        $region66: #{tpu_custom_call.1} parent=11 // pred_check_branch
          %567 = sbr.rel (%p565) target = $region68
        $region67: #{tpu_custom_call.1} parent=11 // pred_region
          _
        $region68: #{tpu_custom_call.1} parent=11 // pred_fallthru
          _
        // Predicated region
        $region69: #{tpu_custom_call.1} parent=11 // pred_check
          %p568 = pneg %p410
        $region70: #{tpu_custom_call.1} parent=11 // pred_check_branch
          %570 = sbr.rel (%p568) target = $region72
        $region71: #{tpu_custom_call.1} parent=11 // pred_region
          _
        $region72: #{tpu_custom_call.1} parent=11 // pred_fallthru
          _
        // Predicated region
        $region73: #{tpu_custom_call.1} parent=11 // pred_check
          %p571 = pneg %p431
        $region74: #{tpu_custom_call.1} parent=11 // pred_check_branch
          %573 = sbr.rel (%p571) target = $region76
        $region75: #{tpu_custom_call.1} parent=11 // pred_region
          _
        $region76: #{tpu_custom_call.1} parent=11 // pred_fallthru
          _
      $region12: #{tpu_custom_call.1} parent=5 // pred_fallthru
        _
      %p574 = scmp.lt.s32.totalorder %s31, 2
      // Predicated region
      $region77: #{tpu_custom_call.1} parent=5 // pred_check
        %p575 = pneg %p574
      $region78: #{tpu_custom_call.1} parent=5 // pred_check_branch
        %577 = sbr.rel (%p575) target = $region80
      $region79: #{tpu_custom_call.1} parent=5 // pred_region
        // Predicated region
        $region81: #{tpu_custom_call.1} parent=79 // pred_check
          %p578 = pneg %p63
        $region82: #{tpu_custom_call.1} parent=79 // pred_check_branch
          %580 = sbr.rel (%p578) target = $region84
        $region83: #{tpu_custom_call.1} parent=79 // pred_region
          %p581 = scmp.lt.s32.totalorder %s38, 1
          %s582 = scalar_select %p581, %s38, 1
          %s583 = smul.addr %s582, 8
          %s584 = scalar_lea.vmem %s0, %s583
        $region84: #{tpu_custom_call.1} parent=79 // pred_fallthru
          _
        // Predicated region
        $region85: #{tpu_custom_call.1} parent=79 // pred_check
          %p585 = pneg %p89
        $region86: #{tpu_custom_call.1} parent=79 // pred_check_branch
          %587 = sbr.rel (%p585) target = $region88
        $region87: #{tpu_custom_call.1} parent=79 // pred_region
          %p588 = scmp.lt.s32.totalorder %s38, 1
          %s589 = scalar_select %p588, %s38, 1
          %s590 = scalar_lea.vmem %s1, %s589
        $region88: #{tpu_custom_call.1} parent=79 // pred_fallthru
          _
      $region80: #{tpu_custom_call.1} parent=5 // pred_fallthru
        _
      %p591 = scmp.le.s32.totalorder 1, %s31
      %p592 = scmp.lt.s32.totalorder %s31, 3
      %p593 = pnand %p591, %p592
      %p594 = pneg %p593
      // Predicated region
      $region89: #{tpu_custom_call.1} parent=5 // pred_check
        _
      $region90: #{tpu_custom_call.1} parent=5 // pred_check_branch
        %596 = sbr.rel (%p593) target = $region92
      $region91: #{tpu_custom_call.1} parent=5 // pred_region
        %s597 = ssub.s32 %s31, 1
        // Predicated region
        $region93: #{tpu_custom_call.1} parent=91 // pred_check
          %p598 = pneg %p137
        $region94: #{tpu_custom_call.1} parent=91 // pred_check_branch
          %600 = sbr.rel (%p598) target = $region96
        $region95: #{tpu_custom_call.1} parent=91 // pred_region
          %601 = dma.done [#allocation5], 16
        $region96: #{tpu_custom_call.1} parent=91 // pred_fallthru
          _
        // Predicated region
        $region97: #{tpu_custom_call.1} parent=91 // pred_check
          %p602 = pneg %p179
        $region98: #{tpu_custom_call.1} parent=91 // pred_check_branch
          %604 = sbr.rel (%p602) target = $region100
        $region99: #{tpu_custom_call.1} parent=91 // pred_region
          %605 = dma.done [#allocation8], 16
        $region100: #{tpu_custom_call.1} parent=91 // pred_fallthru
          _
        // Predicated region
        $region101: #{tpu_custom_call.1} parent=91 // pred_check
          %p606 = pneg %p200
        $region102: #{tpu_custom_call.1} parent=91 // pred_check_branch
          %608 = sbr.rel (%p606) target = $region104
        $region103: #{tpu_custom_call.1} parent=91 // pred_region
          %609 = dma.done [#allocation8], 256
        $region104: #{tpu_custom_call.1} parent=91 // pred_fallthru
          _
        // Predicated region
        $region105: #{tpu_custom_call.1} parent=91 // pred_check
          %p610 = pneg %p221
        $region106: #{tpu_custom_call.1} parent=91 // pred_check_branch
          %612 = sbr.rel (%p610) target = $region108
        $region107: #{tpu_custom_call.1} parent=91 // pred_region
          %613 = dma.done [#allocation11], 16
        $region108: #{tpu_custom_call.1} parent=91 // pred_fallthru
          _
        // Predicated region
        $region109: #{tpu_custom_call.1} parent=91 // pred_check
          %p614 = pneg %p242
        $region110: #{tpu_custom_call.1} parent=91 // pred_check_branch
          %616 = sbr.rel (%p614) target = $region112
        $region111: #{tpu_custom_call.1} parent=91 // pred_region
          %617 = dma.done [#allocation11], 256
        $region112: #{tpu_custom_call.1} parent=91 // pred_fallthru
          _
        // Predicated region
        $region113: #{tpu_custom_call.1} parent=91 // pred_check
          %p618 = pneg %p263
        $region114: #{tpu_custom_call.1} parent=91 // pred_check_branch
          %620 = sbr.rel (%p618) target = $region116
        $region115: #{tpu_custom_call.1} parent=91 // pred_region
          %621 = dma.done [#allocation14], 16
        $region116: #{tpu_custom_call.1} parent=91 // pred_fallthru
          _
        %p622 = scmp.lt.s32.totalorder %s40, 1
        %s623 = scalar_select %p622, %s40, 1
        %s624 = smul.addr %s623, 8
        %s625 = scalar_lea.vmem %s0, %s624
        %p626 = pneg %p69
        %p627 = pneg %p66
        %p628 = scmp.lt.s32.totalorder %s40, 1
        %s629 = scalar_select %p628, %s40, 1
        %s630 = scalar_lea.vmem %s1, %s629
        %p631 = pneg %p95
        %p632 = pneg %p92
        %p633 = pneg %p116
        %p634 = pneg %p113
        %p635 = pneg %p137
        %p636 = pneg %p134
        %p637 = pneg %p158
        %p638 = pneg %p155
        %p639 = pneg %p179
        %p640 = pneg %p176
        %p641 = pneg %p200
        %p642 = pneg %p197
        %p643 = pneg %p221
        %p644 = pneg %p218
        %p645 = pneg %p242
        %p646 = pneg %p239
        %p647 = pneg %p263
        %p648 = pneg %p260
        %p649 = pneg %p284
        %p650 = pneg %p281
        %p651 = pneg %p305
        %p652 = pneg %p302
        %p653 = pneg %p326
        %p654 = pneg %p323
        %p655 = pneg %p347
        %p656 = pneg %p344
        %p657 = pneg %p368
        %p658 = pneg %p365
        %p659 = pneg %p389
        %p660 = pneg %p386
        %p661 = pneg %p410
        %p662 = pneg %p407
        %p663 = pneg %p431
        %p664 = pneg %p428
        %p665 = pneg %p459
        %p666 = pneg %p456
        %s667 = sand.u32 %s446, 1
        %s668 = scalar_lea.sflag [#allocation6], %s667
        %s669 = sand.u32 %s446, 1
        %s670 = smul.addr %s669, 8
        %s671 = scalar_lea.vmem [#allocation15], %s670
        %p672 = scmp.lt.s32.totalorder %s40, 1
        %s673 = scalar_select %p672, %s40, 1
        %s674 = smul.addr %s673, 8
        %s675 = scalar_lea.vmem %s0, %s674
        %p676 = scmp.lt.s32.totalorder %s40, 1
        %s677 = scalar_select %p676, %s40, 1
        %s678 = scalar_lea.vmem %s1, %s677
        %p680 = scmp.eq.s32.totalorder %s41, 0
        // Predicated region
        $region117: #{tpu_custom_call.1} parent=91 // pred_check
          %p681 = pneg %p680
        $region118: #{tpu_custom_call.1} parent=91 // pred_check_branch
          %683 = sbr.rel (%p681) target = $region120
        $region119: #{tpu_custom_call.1} parent=91 // pred_region
          %v684 = vld [vmem:[%s675] sm:$0xff]
          %v685 = vld [vmem:[%s10] sm:$0x1]
          %v686 = vld [vmem:[%s11] sm:$0x1]
          %vm687 = vcmask 261120
          %v688 = vsel %vm687, %v684, 0.0
          %689 = vadd.xlane.f32.xlu0 %v688
          %v690 = vpop.xlane.xlu0 %689
          %v691 = vrcp.pop 32.0
          %v692 = vmul.f32 %v690, %v691
          %v693 = vsub.f32 %v684, %v692
          %v694 = vmul.f32 %v693, %v693
          %v695 = vsel %vm687, %v694, 0.0
          %696 = vadd.xlane.f32.xlu0 %v695
          %v697 = vpop.xlane.xlu0 %696
          %v698 = vmul.f32 %v697, 0.032258064
          %v699 = vrsqrt.pop %v698
          %v700 = vmul.f32 %v698, %v699
          %vm701 = vcmp.eq.f32.partialorder %v698, inf
          %v702 = vsel %vm701, %v698, %v700
          %vm703 = vcmp.eq.f32.partialorder %v698, 0.0
          %v704 = vand.u32 %v698, 2147483648
          %v705 = vsel %vm703, %v704, %v702
          %v706 = vadd.f32 %v705, 1e-06
          %v707 = vrcp.pop %v706
          %v709 = vlaneseq
          %v710 = vshrl.u32 %v709, 7
          %v711 = vsub.s32 0, %v710
          %v712 = vrot.slane %v685, %v711
          %v714 = vmul.f32 %v712, %v693
          %v715 = vmul.f32 %v714, %v707
          %v717 = vlaneseq
          %v718 = vshrl.u32 %v717, 7
          %v719 = vsub.s32 0, %v718
          %v720 = vrot.slane %v686, %v719
          %v722 = vadd.f32 %v715, %v720
          %v723 = vpack.c.bf16 %v722, %v722
          %v724 = vld [vmem:[%s4] sm:$0xf]
          %v725 = vld [vmem:[%s4 + $0x4] sm:$0xf]
          %v726 = vld [vmem:[%s4 + $0x8] sm:$0xf]
          %v727 = vld [vmem:[%s4 + $0xc] sm:$0xf]
          %v728 = vld [vmem:[#allocation7] sm:$0x1]
          %v730 = vlaneseq
          %v731 = vshrl.u32 %v730, 7
          %v732 = vsub.s32 0, %v731
          %v733 = vrot.slane %v728, %v732
          %v739 = vunpack.c.l.b16 %v724
          %v740 = vunpack.c.l.b16 %v725
          %v741 = vunpack.c.l.b16 %v726
          %v742 = vunpack.c.l.b16 %v727
          %v743 = vpack.c.b16 %v740, %v739
          %v744 = vpack.c.b16 %v742, %v741
          %v748 = vsel %vm687, %v723, 0
          %750 = vmatprep.subr.bf16.mxu0 0
          %751 = vmatpush1.bf16.msra.mxu0 %v743
          %752 = vmatprep.subr.bf16.mxu0 0
          %753 = vmatpush1.bf16.msra.mxu0 %v744
          %754 = vmatprep.subr.bf16.mxu0 0
          %755 = vmatpush1.bf16.msra.mxu0 0
          %756 = vmatprep.subr.bf16.mxu0 0
          %757 = vmatpush1.bf16.msra.mxu0 0
          %758 = vmatprep.subr.bf16.mxu0 0
          %759 = vmatpush1.bf16.msra.mxu0 0
          %760 = vmatprep.subr.bf16.mxu0 0
          %761 = vmatpush1.bf16.msra.mxu0 0
          %762 = vmatprep.subr.bf16.mxu0 0
          %763 = vmatpush1.bf16.msra.mxu0 0
          %764 = vmatprep.subr.bf16.mxu0 0
          %765 = vmatpush1.bf16.msra.mxu0 0
          %766 = vmatprep.subr.bf16.mxu0 0
          %767 = vmatpush1.bf16.msra.mxu0 0
          %768 = vmatprep.subr.bf16.mxu0 0
          %769 = vmatpush1.bf16.msra.mxu0 0
          %770 = vmatprep.subr.bf16.mxu0 0
          %771 = vmatpush1.bf16.msra.mxu0 0
          %772 = vmatprep.subr.bf16.mxu0 0
          %773 = vmatpush1.bf16.msra.mxu0 0
          %774 = vmatprep.subr.bf16.mxu0 0
          %775 = vmatpush1.bf16.msra.mxu0 0
          %776 = vmatprep.subr.bf16.mxu0 0
          %777 = vmatpush1.bf16.msra.mxu0 0
          %778 = vmatprep.subr.bf16.mxu0 0
          %779 = vmatpush1.bf16.msra.mxu0 0
          %780 = vmatprep.subr.bf16.mxu0 0
          %781 = vmatpush1.bf16.msra.mxu0 0
          %782 = vmatprep.mubr.bf16.mxu0 0
          %783 = vmatmul.mubr.bf16.gmra.mrb[0].mxu0 %v748
          %v784 = vpop.f32.mrb[0].mxu0
          %v785 = vadd.f32 %v733, %v784
          %v786 = vpop.f32.mrb[0].mxu0
          %v787 = vpop.f32.mrb[0].mxu0
          %v788 = vpop.f32.mrb[0].mxu0
          %789 = vdwg.mxu0
          %v790 = vpack.c.bf16 %v785, %v785
          %v791 = vld [vmem:[#allocation9] sm:$0xf]
          %v792 = vld [vmem:[#allocation9 + $0x4] sm:$0xf]
          %v793 = vld [vmem:[#allocation9 + $0x8] sm:$0xf]
          %v794 = vld [vmem:[#allocation9 + $0xc] sm:$0xf]
          %v795 = vld [vmem:[#allocation10] sm:$0x1]
          %v797 = vlaneseq
          %v798 = vshrl.u32 %v797, 7
          %v799 = vsub.s32 0, %v798
          %v800 = vrot.slane %v795, %v799
          %v806 = vunpack.c.l.b16 %v791
          %v807 = vunpack.c.l.b16 %v792
          %v808 = vunpack.c.l.b16 %v793
          %v809 = vunpack.c.l.b16 %v794
          %v810 = vpack.c.b16 %v807, %v806
          %v811 = vpack.c.b16 %v809, %v808
          %814 = vmatprep.subr.bf16.mxu0 0
          %815 = vmatpush1.bf16.msra.mxu0 %v810
          %816 = vmatprep.subr.bf16.mxu0 0
          %817 = vmatpush1.bf16.msra.mxu0 %v811
          %818 = vmatprep.subr.bf16.mxu0 0
          %819 = vmatpush1.bf16.msra.mxu0 0
          %820 = vmatprep.subr.bf16.mxu0 0
          %821 = vmatpush1.bf16.msra.mxu0 0
          %822 = vmatprep.subr.bf16.mxu0 0
          %823 = vmatpush1.bf16.msra.mxu0 0
          %824 = vmatprep.subr.bf16.mxu0 0
          %825 = vmatpush1.bf16.msra.mxu0 0
          %826 = vmatprep.subr.bf16.mxu0 0
          %827 = vmatpush1.bf16.msra.mxu0 0
          %828 = vmatprep.subr.bf16.mxu0 0
          %829 = vmatpush1.bf16.msra.mxu0 0
          %830 = vmatprep.subr.bf16.mxu0 0
          %831 = vmatpush1.bf16.msra.mxu0 0
          %832 = vmatprep.subr.bf16.mxu0 0
          %833 = vmatpush1.bf16.msra.mxu0 0
          %834 = vmatprep.subr.bf16.mxu0 0
          %835 = vmatpush1.bf16.msra.mxu0 0
          %836 = vmatprep.subr.bf16.mxu0 0
          %837 = vmatpush1.bf16.msra.mxu0 0
          %838 = vmatprep.subr.bf16.mxu0 0
          %839 = vmatpush1.bf16.msra.mxu0 0
          %840 = vmatprep.subr.bf16.mxu0 0
          %841 = vmatpush1.bf16.msra.mxu0 0
          %842 = vmatprep.subr.bf16.mxu0 0
          %843 = vmatpush1.bf16.msra.mxu0 0
          %844 = vmatprep.subr.bf16.mxu0 0
          %845 = vmatpush1.bf16.msra.mxu0 0
          %846 = vmatprep.mubr.bf16.mxu0 0
          %847 = vmatmul.mubr.bf16.gmra.mrb[0].mxu0 %v748
          %v848 = vpop.f32.mrb[0].mxu0
          %v849 = vadd.f32 %v800, %v848
          %v850 = vpop.f32.mrb[0].mxu0
          %v851 = vpop.f32.mrb[0].mxu0
          %v852 = vpop.f32.mrb[0].mxu0
          %853 = vdwg.mxu0
          %v854 = vpack.c.bf16 %v849, %v849
          %856 = vrot.lane.b32.xlu0 %v790, 120
          %v857 = vpop.permute.xlu0 %856
          %858 = vrot.lane.b32.xlu0 %v790, 112
          %v859 = vpop.permute.xlu0 %858
          %860 = vrot.lane.b32.xlu0 %v790, 104
          %v861 = vpop.permute.xlu0 %860
          %v863 = vunpack.c.l.s4 1983009808
          %v864 = vunpack.c.0.s8 %v863
          %v865 = vlaneseq
          %v866 = vshrl.u32 %v865, 7
          %v867 = vsub.s32 %v864, %v866
          %v868 = vrot.slane %v790, %v867
          %v871 = vunpack.c.l.s4 1983009808
          %v872 = vunpack.c.0.s8 %v871
          %v873 = vlaneseq
          %v874 = vshrl.u32 %v873, 7
          %v875 = vsub.s32 %v872, %v874
          %v876 = vrot.slane %v859, %v875
          %v877 = vcombine.low %v868, %v876
          %v878 = vcombine.high %v868, %v876
          %v880 = vunpack.c.l.s4 1934713408
          %v881 = vunpack.c.0.s8 %v880
          %v882 = vlaneseq
          %v883 = vshrl.u32 %v882, 7
          %v884 = vsub.s32 %v881, %v883
          %v885 = vrot.slane %v877, %v884
          %v887 = vunpack.c.l.s4 1934713408
          %v888 = vunpack.c.0.s8 %v887
          %v889 = vlaneseq
          %v890 = vshrl.u32 %v889, 7
          %v891 = vsub.s32 %v888, %v890
          %v892 = vrot.slane %v878, %v891
          %v893 = vcombine.high %v885, 0
          %v894 = vcombine.high %v892, 0
          %v897 = vunpack.c.l.s4 1983009808
          %v898 = vunpack.c.0.s8 %v897
          %v899 = vlaneseq
          %v900 = vshrl.u32 %v899, 7
          %v901 = vsub.s32 %v898, %v900
          %v902 = vrot.slane %v857, %v901
          %v905 = vunpack.c.l.s4 1983009808
          %v906 = vunpack.c.0.s8 %v905
          %v907 = vlaneseq
          %v908 = vshrl.u32 %v907, 7
          %v909 = vsub.s32 %v906, %v908
          %v910 = vrot.slane %v861, %v909
          %v911 = vcombine.low %v902, %v910
          %v912 = vcombine.high %v902, %v910
          %v914 = vunpack.c.l.s4 1934713408
          %v915 = vunpack.c.0.s8 %v914
          %v916 = vlaneseq
          %v917 = vshrl.u32 %v916, 7
          %v918 = vsub.s32 %v915, %v917
          %v919 = vrot.slane %v911, %v918
          %v921 = vunpack.c.l.s4 1934713408
          %v922 = vunpack.c.0.s8 %v921
          %v923 = vlaneseq
          %v924 = vshrl.u32 %v923, 7
          %v925 = vsub.s32 %v922, %v924
          %v926 = vrot.slane %v912, %v925
          %v927 = vcombine.high %v919, 0
          %v928 = vcombine.high %v926, 0
          %v931 = vpack.i.b16 %v919, %v885
          %v933 = vshrl.u32 %v885, 16
          %v934 = vshrl.u32 %v919, 16
          %v935 = vpack.i.b16 %v934, %v933
          %v939 = vpack.i.b16 %v927, %v893
          %v941 = vshrl.u32 %v893, 16
          %v942 = vshrl.u32 %v927, 16
          %v943 = vpack.i.b16 %v942, %v941
          %v947 = vpack.i.b16 %v926, %v892
          %v949 = vshrl.u32 %v892, 16
          %v950 = vshrl.u32 %v926, 16
          %v951 = vpack.i.b16 %v950, %v949
          %v955 = vpack.i.b16 %v928, %v894
          %v957 = vshrl.u32 %v894, 16
          %v958 = vshrl.u32 %v928, 16
          %v959 = vpack.i.b16 %v958, %v957
          %v961 = vcombine.low %v931, %v947
          %v963 = vunpack.c.l.s4 1983009808
          %v964 = vunpack.c.0.s8 %v963
          %v965 = vlaneseq
          %v966 = vshrl.u32 %v965, 7
          %v967 = vsub.s32 %v964, %v966
          %v968 = vrot.slane %v961, %v967
          %v969 = vcombine.low %v939, %v955
          %v971 = vunpack.c.l.s4 1983009808
          %v972 = vunpack.c.0.s8 %v971
          %v973 = vlaneseq
          %v974 = vshrl.u32 %v973, 7
          %v975 = vsub.s32 %v972, %v974
          %v976 = vrot.slane %v969, %v975
          %v977 = vcombine.low %v968, %v976
          %v979 = vunpack.c.l.s4 1934713408
          %v980 = vunpack.c.0.s8 %v979
          %v981 = vlaneseq
          %v982 = vshrl.u32 %v981, 7
          %v983 = vsub.s32 %v980, %v982
          %v984 = vrot.slane %v977, %v983
          %v985 = vcombine.high %v984, 0
          %v986 = vcombine.low %v935, %v951
          %v988 = vunpack.c.l.s4 1983009808
          %v989 = vunpack.c.0.s8 %v988
          %v990 = vlaneseq
          %v991 = vshrl.u32 %v990, 7
          %v992 = vsub.s32 %v989, %v991
          %v993 = vrot.slane %v986, %v992
          %v994 = vcombine.low %v943, %v959
          %v996 = vunpack.c.l.s4 1983009808
          %v997 = vunpack.c.0.s8 %v996
          %v998 = vlaneseq
          %v999 = vshrl.u32 %v998, 7
          %v1000 = vsub.s32 %v997, %v999
          %v1001 = vrot.slane %v994, %v1000
          %v1002 = vcombine.low %v993, %v1001
          %v1004 = vunpack.c.l.s4 1934713408
          %v1005 = vunpack.c.0.s8 %v1004
          %v1006 = vlaneseq
          %v1007 = vshrl.u32 %v1006, 7
          %v1008 = vsub.s32 %v1005, %v1007
          %v1009 = vrot.slane %v1002, %v1008
          %v1010 = vcombine.high %v1009, 0
          %v1013 = vpack.i.b16 %v1009, %v984
          %v1015 = vshrl.u32 %v984, 16
          %v1016 = vshrl.u32 %v1009, 16
          %v1017 = vpack.i.b16 %v1016, %v1015
          %v1021 = vpack.i.b16 %v1010, %v985
          %v1023 = vshrl.u32 %v985, 16
          %v1024 = vshrl.u32 %v1010, 16
          %v1025 = vpack.i.b16 %v1024, %v1023
          %vm1027 = vcmask 60416
          %1028 = vst.msk [vmem:[#allocation2] sm:$0xf] %vm1027, %v1013
          %1029 = vst.msk [vmem:[#allocation2 + $0x4] sm:$0xf] %vm1027, %v1017
          %1030 = vst.msk [vmem:[#allocation2 + $0x8] sm:$0xf] %vm1027, %v1021
          %1031 = vst.msk [vmem:[#allocation2 + $0xc] sm:$0xf] %vm1027, %v1025
          %1033 = vrot.lane.b32.xlu0 %v854, 120
          %v1034 = vpop.permute.xlu0 %1033
          %1035 = vrot.lane.b32.xlu0 %v854, 112
          %v1036 = vpop.permute.xlu0 %1035
          %1037 = vrot.lane.b32.xlu0 %v854, 104
          %v1038 = vpop.permute.xlu0 %1037
          %v1040 = vunpack.c.l.s4 1983009808
          %v1041 = vunpack.c.0.s8 %v1040
          %v1042 = vlaneseq
          %v1043 = vshrl.u32 %v1042, 7
          %v1044 = vsub.s32 %v1041, %v1043
          %v1045 = vrot.slane %v854, %v1044
          %v1048 = vunpack.c.l.s4 1983009808
          %v1049 = vunpack.c.0.s8 %v1048
          %v1050 = vlaneseq
          %v1051 = vshrl.u32 %v1050, 7
          %v1052 = vsub.s32 %v1049, %v1051
          %v1053 = vrot.slane %v1036, %v1052
          %v1054 = vcombine.low %v1045, %v1053
          %v1055 = vcombine.high %v1045, %v1053
          %v1057 = vunpack.c.l.s4 1934713408
          %v1058 = vunpack.c.0.s8 %v1057
          %v1059 = vlaneseq
          %v1060 = vshrl.u32 %v1059, 7
          %v1061 = vsub.s32 %v1058, %v1060
          %v1062 = vrot.slane %v1054, %v1061
          %v1064 = vunpack.c.l.s4 1934713408
          %v1065 = vunpack.c.0.s8 %v1064
          %v1066 = vlaneseq
          %v1067 = vshrl.u32 %v1066, 7
          %v1068 = vsub.s32 %v1065, %v1067
          %v1069 = vrot.slane %v1055, %v1068
          %v1070 = vcombine.high %v1062, 0
          %v1071 = vcombine.high %v1069, 0
          %v1074 = vunpack.c.l.s4 1983009808
          %v1075 = vunpack.c.0.s8 %v1074
          %v1076 = vlaneseq
          %v1077 = vshrl.u32 %v1076, 7
          %v1078 = vsub.s32 %v1075, %v1077
          %v1079 = vrot.slane %v1034, %v1078
          %v1082 = vunpack.c.l.s4 1983009808
          %v1083 = vunpack.c.0.s8 %v1082
          %v1084 = vlaneseq
          %v1085 = vshrl.u32 %v1084, 7
          %v1086 = vsub.s32 %v1083, %v1085
          %v1087 = vrot.slane %v1038, %v1086
          %v1088 = vcombine.low %v1079, %v1087
          %v1089 = vcombine.high %v1079, %v1087
          %v1091 = vunpack.c.l.s4 1934713408
          %v1092 = vunpack.c.0.s8 %v1091
          %v1093 = vlaneseq
          %v1094 = vshrl.u32 %v1093, 7
          %v1095 = vsub.s32 %v1092, %v1094
          %v1096 = vrot.slane %v1088, %v1095
          %v1098 = vunpack.c.l.s4 1934713408
          %v1099 = vunpack.c.0.s8 %v1098
          %v1100 = vlaneseq
          %v1101 = vshrl.u32 %v1100, 7
          %v1102 = vsub.s32 %v1099, %v1101
          %v1103 = vrot.slane %v1089, %v1102
          %v1104 = vcombine.high %v1096, 0
          %v1105 = vcombine.high %v1103, 0
          %v1108 = vpack.i.b16 %v1096, %v1062
          %v1110 = vshrl.u32 %v1062, 16
          %v1111 = vshrl.u32 %v1096, 16
          %v1112 = vpack.i.b16 %v1111, %v1110
          %v1116 = vpack.i.b16 %v1104, %v1070
          %v1118 = vshrl.u32 %v1070, 16
          %v1119 = vshrl.u32 %v1104, 16
          %v1120 = vpack.i.b16 %v1119, %v1118
          %v1124 = vpack.i.b16 %v1103, %v1069
          %v1126 = vshrl.u32 %v1069, 16
          %v1127 = vshrl.u32 %v1103, 16
          %v1128 = vpack.i.b16 %v1127, %v1126
          %v1132 = vpack.i.b16 %v1105, %v1071
          %v1134 = vshrl.u32 %v1071, 16
          %v1135 = vshrl.u32 %v1105, 16
          %v1136 = vpack.i.b16 %v1135, %v1134
          %v1138 = vcombine.low %v1108, %v1124
          %v1140 = vunpack.c.l.s4 1983009808
          %v1141 = vunpack.c.0.s8 %v1140
          %v1142 = vlaneseq
          %v1143 = vshrl.u32 %v1142, 7
          %v1144 = vsub.s32 %v1141, %v1143
          %v1145 = vrot.slane %v1138, %v1144
          %v1146 = vcombine.low %v1116, %v1132
          %v1148 = vunpack.c.l.s4 1983009808
          %v1149 = vunpack.c.0.s8 %v1148
          %v1150 = vlaneseq
          %v1151 = vshrl.u32 %v1150, 7
          %v1152 = vsub.s32 %v1149, %v1151
          %v1153 = vrot.slane %v1146, %v1152
          %v1154 = vcombine.low %v1145, %v1153
          %v1156 = vunpack.c.l.s4 1934713408
          %v1157 = vunpack.c.0.s8 %v1156
          %v1158 = vlaneseq
          %v1159 = vshrl.u32 %v1158, 7
          %v1160 = vsub.s32 %v1157, %v1159
          %v1161 = vrot.slane %v1154, %v1160
          %v1162 = vcombine.high %v1161, 0
          %v1163 = vcombine.low %v1112, %v1128
          %v1165 = vunpack.c.l.s4 1983009808
          %v1166 = vunpack.c.0.s8 %v1165
          %v1167 = vlaneseq
          %v1168 = vshrl.u32 %v1167, 7
          %v1169 = vsub.s32 %v1166, %v1168
          %v1170 = vrot.slane %v1163, %v1169
          %v1171 = vcombine.low %v1120, %v1136
          %v1173 = vunpack.c.l.s4 1983009808
          %v1174 = vunpack.c.0.s8 %v1173
          %v1175 = vlaneseq
          %v1176 = vshrl.u32 %v1175, 7
          %v1177 = vsub.s32 %v1174, %v1176
          %v1178 = vrot.slane %v1171, %v1177
          %v1179 = vcombine.low %v1170, %v1178
          %v1181 = vunpack.c.l.s4 1934713408
          %v1182 = vunpack.c.0.s8 %v1181
          %v1183 = vlaneseq
          %v1184 = vshrl.u32 %v1183, 7
          %v1185 = vsub.s32 %v1182, %v1184
          %v1186 = vrot.slane %v1179, %v1185
          %v1187 = vcombine.high %v1186, 0
          %v1190 = vpack.i.b16 %v1186, %v1161
          %v1192 = vshrl.u32 %v1161, 16
          %v1193 = vshrl.u32 %v1186, 16
          %v1194 = vpack.i.b16 %v1193, %v1192
          %v1198 = vpack.i.b16 %v1187, %v1162
          %v1200 = vshrl.u32 %v1162, 16
          %v1201 = vshrl.u32 %v1187, 16
          %v1202 = vpack.i.b16 %v1201, %v1200
          %1204 = vst.msk [vmem:[#allocation3] sm:$0xf] %vm1027, %v1190
          %1205 = vst.msk [vmem:[#allocation3 + $0x4] sm:$0xf] %vm1027, %v1194
          %1206 = vst.msk [vmem:[#allocation3 + $0x8] sm:$0xf] %vm1027, %v1198
          %1207 = vst.msk [vmem:[#allocation3 + $0xc] sm:$0xf] %vm1027, %v1202
        $region120: #{tpu_custom_call.1} parent=91 // pred_fallthru
          _
        %s1208 = smul.u32 %s41, 8
        %s1209 = scalar_lea.vmem %s675, %s1208
        %v1210 = vld [vmem:[%s1209] sm:$0xff]
        %v1211 = vld [vmem:[%s10] sm:$0x1]
        %v1212 = vld [vmem:[%s11] sm:$0x1]
        %vm1213 = vcmask 261120
        %v1214 = vsel %vm1213, %v1210, 0.0
        %1215 = vadd.xlane.f32.xlu0 %v1214
        %v1216 = vpop.xlane.xlu0 %1215
        %v1217 = vrcp.pop 32.0
        %v1218 = vmul.f32 %v1216, %v1217
        %v1219 = vsub.f32 %v1210, %v1218
        %v1220 = vmul.f32 %v1219, %v1219
        %v1221 = vsel %vm1213, %v1220, 0.0
        %1222 = vadd.xlane.f32.xlu0 %v1221
        %v1223 = vpop.xlane.xlu0 %1222
        %v1224 = vmul.f32 %v1223, 0.032258064
        %v1225 = vrsqrt.pop %v1224
        %v1226 = vmul.f32 %v1224, %v1225
        %vm1227 = vcmp.eq.f32.partialorder %v1224, inf
        %v1228 = vsel %vm1227, %v1224, %v1226
        %vm1229 = vcmp.eq.f32.partialorder %v1224, 0.0
        %v1230 = vand.u32 %v1224, 2147483648
        %v1231 = vsel %vm1229, %v1230, %v1228
        %v1232 = vadd.f32 %v1231, 1e-06
        %v1233 = vrcp.pop %v1232
        %v1235 = vlaneseq
        %v1236 = vshrl.u32 %v1235, 7
        %v1237 = vsub.s32 0, %v1236
        %v1238 = vrot.slane %v1211, %v1237
        %v1240 = vmul.f32 %v1238, %v1219
        %v1241 = vmul.f32 %v1240, %v1233
        %v1243 = vlaneseq
        %v1244 = vshrl.u32 %v1243, 7
        %v1245 = vsub.s32 0, %v1244
        %v1246 = vrot.slane %v1212, %v1245
        %v1248 = vadd.f32 %v1241, %v1246
        %v1249 = vpack.c.bf16 %v1248, %v1248
        %v1250 = vld [vmem:[%s2] sm:$0xf]
        %v1251 = vld [vmem:[%s2 + $0x4] sm:$0xf]
        %v1252 = vld [vmem:[%s2 + $0x8] sm:$0xf]
        %v1253 = vld [vmem:[%s2 + $0xc] sm:$0xf]
        %v1254 = vld [vmem:[#allocation4] sm:$0x1]
        %v1256 = vlaneseq
        %v1257 = vshrl.u32 %v1256, 7
        %v1258 = vsub.s32 0, %v1257
        %v1259 = vrot.slane %v1254, %v1258
        %v1265 = vunpack.c.l.b16 %v1250
        %v1266 = vunpack.c.l.b16 %v1251
        %v1267 = vunpack.c.l.b16 %v1252
        %v1268 = vunpack.c.l.b16 %v1253
        %v1269 = vpack.c.b16 %v1266, %v1265
        %v1270 = vpack.c.b16 %v1268, %v1267
        %v1274 = vsel %vm1213, %v1249, 0
        %1276 = vmatprep.subr.bf16.mxu0 0
        %1277 = vmatpush1.bf16.msra.mxu0 %v1269
        %1278 = vmatprep.subr.bf16.mxu0 0
        %1279 = vmatpush1.bf16.msra.mxu0 %v1270
        %1280 = vmatprep.subr.bf16.mxu0 0
        %1281 = vmatpush1.bf16.msra.mxu0 0
        %1282 = vmatprep.subr.bf16.mxu0 0
        %1283 = vmatpush1.bf16.msra.mxu0 0
        %1284 = vmatprep.subr.bf16.mxu0 0
        %1285 = vmatpush1.bf16.msra.mxu0 0
        %1286 = vmatprep.subr.bf16.mxu0 0
        %1287 = vmatpush1.bf16.msra.mxu0 0
        %1288 = vmatprep.subr.bf16.mxu0 0
        %1289 = vmatpush1.bf16.msra.mxu0 0
        %1290 = vmatprep.subr.bf16.mxu0 0
        %1291 = vmatpush1.bf16.msra.mxu0 0
        %1292 = vmatprep.subr.bf16.mxu0 0
        %1293 = vmatpush1.bf16.msra.mxu0 0
        %1294 = vmatprep.subr.bf16.mxu0 0
        %1295 = vmatpush1.bf16.msra.mxu0 0
        %1296 = vmatprep.subr.bf16.mxu0 0
        %1297 = vmatpush1.bf16.msra.mxu0 0
        %1298 = vmatprep.subr.bf16.mxu0 0
        %1299 = vmatpush1.bf16.msra.mxu0 0
        %1300 = vmatprep.subr.bf16.mxu0 0
        %1301 = vmatpush1.bf16.msra.mxu0 0
        %1302 = vmatprep.subr.bf16.mxu0 0
        %1303 = vmatpush1.bf16.msra.mxu0 0
        %1304 = vmatprep.subr.bf16.mxu0 0
        %1305 = vmatpush1.bf16.msra.mxu0 0
        %1306 = vmatprep.subr.bf16.mxu0 0
        %1307 = vmatpush1.bf16.msra.mxu0 0
        %1308 = vmatprep.mubr.bf16.mxu0 0
        %1309 = vmatmul.mubr.bf16.gmra.mrb[0].mxu0 %v1274
        %v1310 = vpop.f32.mrb[0].mxu0
        %v1311 = vadd.f32 %v1259, %v1310
        %v1312 = vpop.f32.mrb[0].mxu0
        %v1313 = vpop.f32.mrb[0].mxu0
        %v1314 = vpop.f32.mrb[0].mxu0
        %1315 = vdwg.mxu0
        %v1316 = vpack.c.bf16 %v1311, %v1311
        %1318 = vrot.lane.b32.xlu0 %v1316, 120
        %v1319 = vpop.permute.xlu0 %1318
        %1320 = vrot.lane.b32.xlu0 %v1316, 112
        %v1321 = vpop.permute.xlu0 %1320
        %1322 = vrot.lane.b32.xlu0 %v1316, 104
        %v1323 = vpop.permute.xlu0 %1322
        %v1325 = vunpack.c.l.s4 1983009808
        %v1326 = vunpack.c.0.s8 %v1325
        %v1327 = vlaneseq
        %v1328 = vshrl.u32 %v1327, 7
        %v1329 = vsub.s32 %v1326, %v1328
        %v1330 = vrot.slane %v1316, %v1329
        %v1333 = vunpack.c.l.s4 1983009808
        %v1334 = vunpack.c.0.s8 %v1333
        %v1335 = vlaneseq
        %v1336 = vshrl.u32 %v1335, 7
        %v1337 = vsub.s32 %v1334, %v1336
        %v1338 = vrot.slane %v1321, %v1337
        %v1339 = vcombine.low %v1330, %v1338
        %v1340 = vcombine.high %v1330, %v1338
        %v1342 = vunpack.c.l.s4 1934713408
        %v1343 = vunpack.c.0.s8 %v1342
        %v1344 = vlaneseq
        %v1345 = vshrl.u32 %v1344, 7
        %v1346 = vsub.s32 %v1343, %v1345
        %v1347 = vrot.slane %v1339, %v1346
        %v1349 = vunpack.c.l.s4 1934713408
        %v1350 = vunpack.c.0.s8 %v1349
        %v1351 = vlaneseq
        %v1352 = vshrl.u32 %v1351, 7
        %v1353 = vsub.s32 %v1350, %v1352
        %v1354 = vrot.slane %v1340, %v1353
        %v1355 = vcombine.high %v1347, 0
        %v1356 = vcombine.high %v1354, 0
        %v1359 = vunpack.c.l.s4 1983009808
        %v1360 = vunpack.c.0.s8 %v1359
        %v1361 = vlaneseq
        %v1362 = vshrl.u32 %v1361, 7
        %v1363 = vsub.s32 %v1360, %v1362
        %v1364 = vrot.slane %v1319, %v1363
        %v1367 = vunpack.c.l.s4 1983009808
        %v1368 = vunpack.c.0.s8 %v1367
        %v1369 = vlaneseq
        %v1370 = vshrl.u32 %v1369, 7
        %v1371 = vsub.s32 %v1368, %v1370
        %v1372 = vrot.slane %v1323, %v1371
        %v1373 = vcombine.low %v1364, %v1372
        %v1374 = vcombine.high %v1364, %v1372
        %v1376 = vunpack.c.l.s4 1934713408
        %v1377 = vunpack.c.0.s8 %v1376
        %v1378 = vlaneseq
        %v1379 = vshrl.u32 %v1378, 7
        %v1380 = vsub.s32 %v1377, %v1379
        %v1381 = vrot.slane %v1373, %v1380
        %v1383 = vunpack.c.l.s4 1934713408
        %v1384 = vunpack.c.0.s8 %v1383
        %v1385 = vlaneseq
        %v1386 = vshrl.u32 %v1385, 7
        %v1387 = vsub.s32 %v1384, %v1386
        %v1388 = vrot.slane %v1374, %v1387
        %v1389 = vcombine.high %v1381, 0
        %v1390 = vcombine.high %v1388, 0
        %v1393 = vpack.i.b16 %v1381, %v1347
        %v1395 = vshrl.u32 %v1347, 16
        %v1396 = vshrl.u32 %v1381, 16
        %v1397 = vpack.i.b16 %v1396, %v1395
        %v1401 = vpack.i.b16 %v1389, %v1355
        %v1403 = vshrl.u32 %v1355, 16
        %v1404 = vshrl.u32 %v1389, 16
        %v1405 = vpack.i.b16 %v1404, %v1403
        %v1409 = vpack.i.b16 %v1388, %v1354
        %v1411 = vshrl.u32 %v1354, 16
        %v1412 = vshrl.u32 %v1388, 16
        %v1413 = vpack.i.b16 %v1412, %v1411
        %v1417 = vpack.i.b16 %v1390, %v1356
        %v1419 = vshrl.u32 %v1356, 16
        %v1420 = vshrl.u32 %v1390, 16
        %v1421 = vpack.i.b16 %v1420, %v1419
        %v1423 = vcombine.low %v1393, %v1409
        %v1425 = vunpack.c.l.s4 1983009808
        %v1426 = vunpack.c.0.s8 %v1425
        %v1427 = vlaneseq
        %v1428 = vshrl.u32 %v1427, 7
        %v1429 = vsub.s32 %v1426, %v1428
        %v1430 = vrot.slane %v1423, %v1429
        %v1431 = vcombine.low %v1401, %v1417
        %v1433 = vunpack.c.l.s4 1983009808
        %v1434 = vunpack.c.0.s8 %v1433
        %v1435 = vlaneseq
        %v1436 = vshrl.u32 %v1435, 7
        %v1437 = vsub.s32 %v1434, %v1436
        %v1438 = vrot.slane %v1431, %v1437
        %v1439 = vcombine.low %v1430, %v1438
        %v1441 = vunpack.c.l.s4 1934713408
        %v1442 = vunpack.c.0.s8 %v1441
        %v1443 = vlaneseq
        %v1444 = vshrl.u32 %v1443, 7
        %v1445 = vsub.s32 %v1442, %v1444
        %v1446 = vrot.slane %v1439, %v1445
        %v1447 = vcombine.high %v1446, 0
        %v1448 = vcombine.low %v1397, %v1413
        %v1450 = vunpack.c.l.s4 1983009808
        %v1451 = vunpack.c.0.s8 %v1450
        %v1452 = vlaneseq
        %v1453 = vshrl.u32 %v1452, 7
        %v1454 = vsub.s32 %v1451, %v1453
        %v1455 = vrot.slane %v1448, %v1454
        %v1456 = vcombine.low %v1405, %v1421
        %v1458 = vunpack.c.l.s4 1983009808
        %v1459 = vunpack.c.0.s8 %v1458
        %v1460 = vlaneseq
        %v1461 = vshrl.u32 %v1460, 7
        %v1462 = vsub.s32 %v1459, %v1461
        %v1463 = vrot.slane %v1456, %v1462
        %v1464 = vcombine.low %v1455, %v1463
        %v1466 = vunpack.c.l.s4 1934713408
        %v1467 = vunpack.c.0.s8 %v1466
        %v1468 = vlaneseq
        %v1469 = vshrl.u32 %v1468, 7
        %v1470 = vsub.s32 %v1467, %v1469
        %v1471 = vrot.slane %v1464, %v1470
        %v1472 = vcombine.high %v1471, 0
        %v1475 = vpack.i.b16 %v1471, %v1446
        %v1476 = vshrl.u32 %v1446, 16
        %v1477 = vshrl.u32 %v1471, 16
        %v1478 = vpack.i.b16 %v1477, %v1476
        %v1481 = vpack.i.b16 %v1472, %v1447
        %v1482 = vshrl.u32 %v1447, 16
        %v1483 = vshrl.u32 %v1472, 16
        %v1484 = vpack.i.b16 %v1483, %v1482
        %v1485 = vld [vmem:[#allocation2] sm:$0xf]
        %v1486 = vld [vmem:[#allocation2 + $0x4] sm:$0xf]
        %v1487 = vld [vmem:[#allocation2 + $0x8] sm:$0xf]
        %v1488 = vld [vmem:[#allocation2 + $0xc] sm:$0xf]
        %v1489 = vld [vmem:[#allocation3] sm:$0xf]
        %v1490 = vld [vmem:[#allocation3 + $0x4] sm:$0xf]
        %v1491 = vld [vmem:[#allocation3 + $0x8] sm:$0xf]
        %v1492 = vld [vmem:[#allocation3 + $0xc] sm:$0xf]
        %v1493 = vld [vmem:[%s678] sm:$0x1]
        %v1494 = vsub.f32 %v1493, 1.0
        %v1495 = vmul.f32 %v1494, 1e+09
        %v1497 = vlaneseq
        %v1498 = vshrl.u32 %v1497, 7
        %v1499 = vsub.s32 0, %v1498
        %v1500 = vrot.slane %v1495, %v1499
        %vm1502 = vcmask 64512
        %v1504 = vsel %vm1502, %v1475, 0
        %v1507 = vsel %vm1502, %v1485, 0
        %1509 = vmatprep.subr.bf16.mxu0 0
        %1510 = vmatpush1.bf16.xpose.msra.mxu0 %v1507
        %1511 = vmatprep.subr.bf16.mxu0 0
        %1512 = vmatpush1.bf16.xpose.msra.mxu0 0
        %1513 = vmatprep.subr.bf16.mxu0 0
        %1514 = vmatpush1.bf16.xpose.msra.mxu0 0
        %1515 = vmatprep.subr.bf16.mxu0 0
        %1516 = vmatpush1.bf16.xpose.msra.mxu0 0
        %1517 = vmatprep.subr.bf16.mxu0 0
        %1518 = vmatpush1.bf16.xpose.msra.mxu0 0
        %1519 = vmatprep.subr.bf16.mxu0 0
        %1520 = vmatpush1.bf16.xpose.msra.mxu0 0
        %1521 = vmatprep.subr.bf16.mxu0 0
        %1522 = vmatpush1.bf16.xpose.msra.mxu0 0
        %1523 = vmatprep.subr.bf16.mxu0 0
        %1524 = vmatpush1.bf16.xpose.msra.mxu0 0
        %1525 = vmatprep.subr.bf16.mxu0 0
        %1526 = vmatpush1.bf16.xpose.msra.mxu0 0
        %1527 = vmatprep.subr.bf16.mxu0 0
        %1528 = vmatpush1.bf16.xpose.msra.mxu0 0
        %1529 = vmatprep.subr.bf16.mxu0 0
        %1530 = vmatpush1.bf16.xpose.msra.mxu0 0
        %1531 = vmatprep.subr.bf16.mxu0 0
        %1532 = vmatpush1.bf16.xpose.msra.mxu0 0
        %1533 = vmatprep.subr.bf16.mxu0 0
        %1534 = vmatpush1.bf16.xpose.msra.mxu0 0
        %1535 = vmatprep.subr.bf16.mxu0 0
        %1536 = vmatpush1.bf16.xpose.msra.mxu0 0
        %1537 = vmatprep.subr.bf16.mxu0 0
        %1538 = vmatpush1.bf16.xpose.msra.mxu0 0
        %1539 = vmatprep.subr.bf16.mxu0 0
        %1540 = vmatpush1.bf16.xpose.msra.mxu0 0
        %1541 = vmatprep.mubr.bf16.mxu0 0
        %1542 = vmatmul.mubr.bf16.gmra.mrb[0].mxu0 %v1504
        %v1543 = vpop.f32.mrb[0].mxu0
        %v1544 = vadd.f32 %v1500, %v1543
        %v1545 = vpop.f32.mrb[0].mxu0
        %v1546 = vpop.f32.mrb[0].mxu0
        %v1547 = vpop.f32.mrb[0].mxu0
        %1548 = vdwg.mxu0
        %v1550 = vsel %vm1502, %v1478, 0
        %v1553 = vsel %vm1502, %v1486, 0
        %1555 = vmatprep.subr.bf16.mxu0 0
        %1556 = vmatpush1.bf16.xpose.msra.mxu0 %v1553
        %1557 = vmatprep.subr.bf16.mxu0 0
        %1558 = vmatpush1.bf16.xpose.msra.mxu0 0
        %1559 = vmatprep.subr.bf16.mxu0 0
        %1560 = vmatpush1.bf16.xpose.msra.mxu0 0
        %1561 = vmatprep.subr.bf16.mxu0 0
        %1562 = vmatpush1.bf16.xpose.msra.mxu0 0
        %1563 = vmatprep.subr.bf16.mxu0 0
        %1564 = vmatpush1.bf16.xpose.msra.mxu0 0
        %1565 = vmatprep.subr.bf16.mxu0 0
        %1566 = vmatpush1.bf16.xpose.msra.mxu0 0
        %1567 = vmatprep.subr.bf16.mxu0 0
        %1568 = vmatpush1.bf16.xpose.msra.mxu0 0
        %1569 = vmatprep.subr.bf16.mxu0 0
        %1570 = vmatpush1.bf16.xpose.msra.mxu0 0
        %1571 = vmatprep.subr.bf16.mxu0 0
        %1572 = vmatpush1.bf16.xpose.msra.mxu0 0
        %1573 = vmatprep.subr.bf16.mxu0 0
        %1574 = vmatpush1.bf16.xpose.msra.mxu0 0
        %1575 = vmatprep.subr.bf16.mxu0 0
        %1576 = vmatpush1.bf16.xpose.msra.mxu0 0
        %1577 = vmatprep.subr.bf16.mxu0 0
        %1578 = vmatpush1.bf16.xpose.msra.mxu0 0
        %1579 = vmatprep.subr.bf16.mxu0 0
        %1580 = vmatpush1.bf16.xpose.msra.mxu0 0
        %1581 = vmatprep.subr.bf16.mxu0 0
        %1582 = vmatpush1.bf16.xpose.msra.mxu0 0
        %1583 = vmatprep.subr.bf16.mxu0 0
        %1584 = vmatpush1.bf16.xpose.msra.mxu0 0
        %1585 = vmatprep.subr.bf16.mxu0 0
        %1586 = vmatpush1.bf16.xpose.msra.mxu0 0
        %1587 = vmatprep.mubr.bf16.mxu0 0
        %1588 = vmatmul.mubr.bf16.gmra.mrb[0].mxu0 %v1550
        %v1589 = vpop.f32.mrb[0].mxu0
        %v1590 = vadd.f32 %v1500, %v1589
        %v1591 = vpop.f32.mrb[0].mxu0
        %v1592 = vpop.f32.mrb[0].mxu0
        %v1593 = vpop.f32.mrb[0].mxu0
        %1594 = vdwg.mxu0
        %v1596 = vsel %vm1502, %v1481, 0
        %v1599 = vsel %vm1502, %v1487, 0
        %1601 = vmatprep.subr.bf16.mxu0 0
        %1602 = vmatpush1.bf16.xpose.msra.mxu0 %v1599
        %1603 = vmatprep.subr.bf16.mxu0 0
        %1604 = vmatpush1.bf16.xpose.msra.mxu0 0
        %1605 = vmatprep.subr.bf16.mxu0 0
        %1606 = vmatpush1.bf16.xpose.msra.mxu0 0
        %1607 = vmatprep.subr.bf16.mxu0 0
        %1608 = vmatpush1.bf16.xpose.msra.mxu0 0
        %1609 = vmatprep.subr.bf16.mxu0 0
        %1610 = vmatpush1.bf16.xpose.msra.mxu0 0
        %1611 = vmatprep.subr.bf16.mxu0 0
        %1612 = vmatpush1.bf16.xpose.msra.mxu0 0
        %1613 = vmatprep.subr.bf16.mxu0 0
        %1614 = vmatpush1.bf16.xpose.msra.mxu0 0
        %1615 = vmatprep.subr.bf16.mxu0 0
        %1616 = vmatpush1.bf16.xpose.msra.mxu0 0
        %1617 = vmatprep.subr.bf16.mxu0 0
        %1618 = vmatpush1.bf16.xpose.msra.mxu0 0
        %1619 = vmatprep.subr.bf16.mxu0 0
        %1620 = vmatpush1.bf16.xpose.msra.mxu0 0
        %1621 = vmatprep.subr.bf16.mxu0 0
        %1622 = vmatpush1.bf16.xpose.msra.mxu0 0
        %1623 = vmatprep.subr.bf16.mxu0 0
        %1624 = vmatpush1.bf16.xpose.msra.mxu0 0
        %1625 = vmatprep.subr.bf16.mxu0 0
        %1626 = vmatpush1.bf16.xpose.msra.mxu0 0
        %1627 = vmatprep.subr.bf16.mxu0 0
        %1628 = vmatpush1.bf16.xpose.msra.mxu0 0
        %1629 = vmatprep.subr.bf16.mxu0 0
        %1630 = vmatpush1.bf16.xpose.msra.mxu0 0
        %1631 = vmatprep.subr.bf16.mxu0 0
        %1632 = vmatpush1.bf16.xpose.msra.mxu0 0
        %1633 = vmatprep.mubr.bf16.mxu0 0
        %1634 = vmatmul.mubr.bf16.gmra.mrb[0].mxu0 %v1596
        %v1635 = vpop.f32.mrb[0].mxu0
        %v1636 = vadd.f32 %v1500, %v1635
        %v1637 = vpop.f32.mrb[0].mxu0
        %v1638 = vpop.f32.mrb[0].mxu0
        %v1639 = vpop.f32.mrb[0].mxu0
        %1640 = vdwg.mxu0
        %v1642 = vsel %vm1502, %v1484, 0
        %v1645 = vsel %vm1502, %v1488, 0
        %1647 = vmatprep.subr.bf16.mxu0 0
        %1648 = vmatpush1.bf16.xpose.msra.mxu0 %v1645
        %1649 = vmatprep.subr.bf16.mxu0 0
        %1650 = vmatpush1.bf16.xpose.msra.mxu0 0
        %1651 = vmatprep.subr.bf16.mxu0 0
        %1652 = vmatpush1.bf16.xpose.msra.mxu0 0
        %1653 = vmatprep.subr.bf16.mxu0 0
        %1654 = vmatpush1.bf16.xpose.msra.mxu0 0
        %1655 = vmatprep.subr.bf16.mxu0 0
        %1656 = vmatpush1.bf16.xpose.msra.mxu0 0
        %1657 = vmatprep.subr.bf16.mxu0 0
        %1658 = vmatpush1.bf16.xpose.msra.mxu0 0
        %1659 = vmatprep.subr.bf16.mxu0 0
        %1660 = vmatpush1.bf16.xpose.msra.mxu0 0
        %1661 = vmatprep.subr.bf16.mxu0 0
        %1662 = vmatpush1.bf16.xpose.msra.mxu0 0
        %1663 = vmatprep.subr.bf16.mxu0 0
        %1664 = vmatpush1.bf16.xpose.msra.mxu0 0
        %1665 = vmatprep.subr.bf16.mxu0 0
        %1666 = vmatpush1.bf16.xpose.msra.mxu0 0
        %1667 = vmatprep.subr.bf16.mxu0 0
        %1668 = vmatpush1.bf16.xpose.msra.mxu0 0
        %1669 = vmatprep.subr.bf16.mxu0 0
        %1670 = vmatpush1.bf16.xpose.msra.mxu0 0
        %1671 = vmatprep.subr.bf16.mxu0 0
        %1672 = vmatpush1.bf16.xpose.msra.mxu0 0
        %1673 = vmatprep.subr.bf16.mxu0 0
        %1674 = vmatpush1.bf16.xpose.msra.mxu0 0
        %1675 = vmatprep.subr.bf16.mxu0 0
        %1676 = vmatpush1.bf16.xpose.msra.mxu0 0
        %1677 = vmatprep.subr.bf16.mxu0 0
        %1678 = vmatpush1.bf16.xpose.msra.mxu0 0
        %1679 = vmatprep.mubr.bf16.mxu0 0
        %1680 = vmatmul.mubr.bf16.gmra.mrb[0].mxu0 %v1642
        %v1681 = vpop.f32.mrb[0].mxu0
        %v1682 = vadd.f32 %v1500, %v1681
        %v1683 = vpop.f32.mrb[0].mxu0
        %v1684 = vpop.f32.mrb[0].mxu0
        %v1685 = vpop.f32.mrb[0].mxu0
        %1686 = vdwg.mxu0
        %v1687 = vsel %vm1502, %v1544, -inf
        %1688 = vmax.xlane.f32.xlu0 %v1687
        %v1689 = vpop.xlane.xlu0 %1688
        %v1690 = vsel %vm1502, %v1590, -inf
        %1691 = vmax.xlane.f32.xlu0 %v1690
        %v1692 = vpop.xlane.xlu0 %1691
        %v1693 = vsel %vm1502, %v1636, -inf
        %1694 = vmax.xlane.f32.xlu0 %v1693
        %v1695 = vpop.xlane.xlu0 %1694
        %v1696 = vsel %vm1502, %v1682, -inf
        %1697 = vmax.xlane.f32.xlu0 %v1696
        %v1698 = vpop.xlane.xlu0 %1697
        %v1699 = vsub.f32 -inf, %v1689
        %v1700 = vsub.f32 -inf, %v1692
        %v1701 = vsub.f32 -inf, %v1695
        %v1702 = vsub.f32 -inf, %v1698
        %v1703 = vmul.f32 %v1699, 1.442695
        %v1704 = vpow.pop %v1703
        %v1705 = vmul.f32 %v1700, 1.442695
        %v1706 = vpow.pop %v1705
        %v1707 = vmul.f32 %v1701, 1.442695
        %v1708 = vpow.pop %v1707
        %v1709 = vmul.f32 %v1702, 1.442695
        %v1710 = vpow.pop %v1709
        %v1711 = vsub.f32 %v1544, %v1689
        %v1712 = vsub.f32 %v1590, %v1692
        %v1713 = vsub.f32 %v1636, %v1695
        %v1714 = vsub.f32 %v1682, %v1698
        %v1715 = vmul.f32 %v1711, 1.442695
        %v1716 = vpow.pop %v1715
        %v1717 = vmul.f32 %v1712, 1.442695
        %v1718 = vpow.pop %v1717
        %v1719 = vmul.f32 %v1713, 1.442695
        %v1720 = vpow.pop %v1719
        %v1721 = vmul.f32 %v1714, 1.442695
        %v1722 = vpow.pop %v1721
        %v1723 = vmul.f32 %v1704, 0.0
        %v1724 = vmul.f32 %v1706, 0.0
        %v1725 = vmul.f32 %v1708, 0.0
        %v1726 = vmul.f32 %v1710, 0.0
        %v1727 = vsel %vm1502, %v1716, 0.0
        %1728 = vadd.xlane.f32.xlu0 %v1727
        %v1729 = vpop.xlane.xlu0 %1728
        %v1730 = vsel %vm1502, %v1718, 0.0
        %1731 = vadd.xlane.f32.xlu0 %v1730
        %v1732 = vpop.xlane.xlu0 %1731
        %v1733 = vsel %vm1502, %v1720, 0.0
        %1734 = vadd.xlane.f32.xlu0 %v1733
        %v1735 = vpop.xlane.xlu0 %1734
        %v1736 = vsel %vm1502, %v1722, 0.0
        %1737 = vadd.xlane.f32.xlu0 %v1736
        %v1738 = vpop.xlane.xlu0 %1737
        %v1739 = vadd.f32 %v1723, %v1729
        %v1740 = vadd.f32 %v1724, %v1732
        %v1741 = vadd.f32 %v1725, %v1735
        %v1742 = vadd.f32 %v1726, %v1738
        %v1743 = vpack.c.bf16 %v1716, %v1716
        %v1744 = vpack.c.bf16 %v1718, %v1718
        %v1745 = vpack.c.bf16 %v1720, %v1720
        %v1746 = vpack.c.bf16 %v1722, %v1722
        %v1748 = vsel %vm1502, %v1743, 0
        %vm1750 = vcmask 1043456
        %v1752 = vsel %vm1750, %v1489, 0
        %1754 = vmatprep.subr.bf16.mxu0 0
        %1755 = vmatpush1.bf16.msra.mxu0 %v1752
        %1756 = vmatprep.subr.bf16.mxu0 0
        %1757 = vmatpush1.bf16.msra.mxu0 0
        %1758 = vmatprep.subr.bf16.mxu0 0
        %1759 = vmatpush1.bf16.msra.mxu0 0
        %1760 = vmatprep.subr.bf16.mxu0 0
        %1761 = vmatpush1.bf16.msra.mxu0 0
        %1762 = vmatprep.subr.bf16.mxu0 0
        %1763 = vmatpush1.bf16.msra.mxu0 0
        %1764 = vmatprep.subr.bf16.mxu0 0
        %1765 = vmatpush1.bf16.msra.mxu0 0
        %1766 = vmatprep.subr.bf16.mxu0 0
        %1767 = vmatpush1.bf16.msra.mxu0 0
        %1768 = vmatprep.subr.bf16.mxu0 0
        %1769 = vmatpush1.bf16.msra.mxu0 0
        %1770 = vmatprep.subr.bf16.mxu0 0
        %1771 = vmatpush1.bf16.msra.mxu0 0
        %1772 = vmatprep.subr.bf16.mxu0 0
        %1773 = vmatpush1.bf16.msra.mxu0 0
        %1774 = vmatprep.subr.bf16.mxu0 0
        %1775 = vmatpush1.bf16.msra.mxu0 0
        %1776 = vmatprep.subr.bf16.mxu0 0
        %1777 = vmatpush1.bf16.msra.mxu0 0
        %1778 = vmatprep.subr.bf16.mxu0 0
        %1779 = vmatpush1.bf16.msra.mxu0 0
        %1780 = vmatprep.subr.bf16.mxu0 0
        %1781 = vmatpush1.bf16.msra.mxu0 0
        %1782 = vmatprep.subr.bf16.mxu0 0
        %1783 = vmatpush1.bf16.msra.mxu0 0
        %1784 = vmatprep.subr.bf16.mxu0 0
        %1785 = vmatpush1.bf16.msra.mxu0 0
        %1786 = vmatprep.mubr.bf16.mxu0 0
        %1787 = vmatmul.mubr.bf16.gmra.mrb[0].mxu0 %v1748
        %v1788 = vpop.f32.mrb[0].mxu0
        %v1789 = vadd.f32 0.0, %v1788
        %v1790 = vpop.f32.mrb[0].mxu0
        %v1791 = vpop.f32.mrb[0].mxu0
        %v1792 = vpop.f32.mrb[0].mxu0
        %1793 = vdwg.mxu0
        %v1795 = vsel %vm1502, %v1744, 0
        %v1798 = vsel %vm1750, %v1490, 0
        %1800 = vmatprep.subr.bf16.mxu0 0
        %1801 = vmatpush1.bf16.msra.mxu0 %v1798
        %1802 = vmatprep.subr.bf16.mxu0 0
        %1803 = vmatpush1.bf16.msra.mxu0 0
        %1804 = vmatprep.subr.bf16.mxu0 0
        %1805 = vmatpush1.bf16.msra.mxu0 0
        %1806 = vmatprep.subr.bf16.mxu0 0
        %1807 = vmatpush1.bf16.msra.mxu0 0
        %1808 = vmatprep.subr.bf16.mxu0 0
        %1809 = vmatpush1.bf16.msra.mxu0 0
        %1810 = vmatprep.subr.bf16.mxu0 0
        %1811 = vmatpush1.bf16.msra.mxu0 0
        %1812 = vmatprep.subr.bf16.mxu0 0
        %1813 = vmatpush1.bf16.msra.mxu0 0
        %1814 = vmatprep.subr.bf16.mxu0 0
        %1815 = vmatpush1.bf16.msra.mxu0 0
        %1816 = vmatprep.subr.bf16.mxu0 0
        %1817 = vmatpush1.bf16.msra.mxu0 0
        %1818 = vmatprep.subr.bf16.mxu0 0
        %1819 = vmatpush1.bf16.msra.mxu0 0
        %1820 = vmatprep.subr.bf16.mxu0 0
        %1821 = vmatpush1.bf16.msra.mxu0 0
        %1822 = vmatprep.subr.bf16.mxu0 0
        %1823 = vmatpush1.bf16.msra.mxu0 0
        %1824 = vmatprep.subr.bf16.mxu0 0
        %1825 = vmatpush1.bf16.msra.mxu0 0
        %1826 = vmatprep.subr.bf16.mxu0 0
        %1827 = vmatpush1.bf16.msra.mxu0 0
        %1828 = vmatprep.subr.bf16.mxu0 0
        %1829 = vmatpush1.bf16.msra.mxu0 0
        %1830 = vmatprep.subr.bf16.mxu0 0
        %1831 = vmatpush1.bf16.msra.mxu0 0
        %1832 = vmatprep.mubr.bf16.mxu0 0
        %1833 = vmatmul.mubr.bf16.gmra.mrb[0].mxu0 %v1795
        %v1834 = vpop.f32.mrb[0].mxu0
        %v1835 = vadd.f32 0.0, %v1834
        %v1836 = vpop.f32.mrb[0].mxu0
        %v1837 = vpop.f32.mrb[0].mxu0
        %v1838 = vpop.f32.mrb[0].mxu0
        %1839 = vdwg.mxu0
        %v1841 = vsel %vm1502, %v1745, 0
        %v1844 = vsel %vm1750, %v1491, 0
        %1846 = vmatprep.subr.bf16.mxu0 0
        %1847 = vmatpush1.bf16.msra.mxu0 %v1844
        %1848 = vmatprep.subr.bf16.mxu0 0
        %1849 = vmatpush1.bf16.msra.mxu0 0
        %1850 = vmatprep.subr.bf16.mxu0 0
        %1851 = vmatpush1.bf16.msra.mxu0 0
        %1852 = vmatprep.subr.bf16.mxu0 0
        %1853 = vmatpush1.bf16.msra.mxu0 0
        %1854 = vmatprep.subr.bf16.mxu0 0
        %1855 = vmatpush1.bf16.msra.mxu0 0
        %1856 = vmatprep.subr.bf16.mxu0 0
        %1857 = vmatpush1.bf16.msra.mxu0 0
        %1858 = vmatprep.subr.bf16.mxu0 0
        %1859 = vmatpush1.bf16.msra.mxu0 0
        %1860 = vmatprep.subr.bf16.mxu0 0
        %1861 = vmatpush1.bf16.msra.mxu0 0
        %1862 = vmatprep.subr.bf16.mxu0 0
        %1863 = vmatpush1.bf16.msra.mxu0 0
        %1864 = vmatprep.subr.bf16.mxu0 0
        %1865 = vmatpush1.bf16.msra.mxu0 0
        %1866 = vmatprep.subr.bf16.mxu0 0
        %1867 = vmatpush1.bf16.msra.mxu0 0
        %1868 = vmatprep.subr.bf16.mxu0 0
        %1869 = vmatpush1.bf16.msra.mxu0 0
        %1870 = vmatprep.subr.bf16.mxu0 0
        %1871 = vmatpush1.bf16.msra.mxu0 0
        %1872 = vmatprep.subr.bf16.mxu0 0
        %1873 = vmatpush1.bf16.msra.mxu0 0
        %1874 = vmatprep.subr.bf16.mxu0 0
        %1875 = vmatpush1.bf16.msra.mxu0 0
        %1876 = vmatprep.subr.bf16.mxu0 0
        %1877 = vmatpush1.bf16.msra.mxu0 0
        %1878 = vmatprep.mubr.bf16.mxu0 0
        %1879 = vmatmul.mubr.bf16.gmra.mrb[0].mxu0 %v1841
        %v1880 = vpop.f32.mrb[0].mxu0
        %v1881 = vadd.f32 0.0, %v1880
        %v1882 = vpop.f32.mrb[0].mxu0
        %v1883 = vpop.f32.mrb[0].mxu0
        %v1884 = vpop.f32.mrb[0].mxu0
        %1885 = vdwg.mxu0
        %v1887 = vsel %vm1502, %v1746, 0
        %v1890 = vsel %vm1750, %v1492, 0
        %1892 = vmatprep.subr.bf16.mxu0 0
        %1893 = vmatpush1.bf16.msra.mxu0 %v1890
        %1894 = vmatprep.subr.bf16.mxu0 0
        %1895 = vmatpush1.bf16.msra.mxu0 0
        %1896 = vmatprep.subr.bf16.mxu0 0
        %1897 = vmatpush1.bf16.msra.mxu0 0
        %1898 = vmatprep.subr.bf16.mxu0 0
        %1899 = vmatpush1.bf16.msra.mxu0 0
        %1900 = vmatprep.subr.bf16.mxu0 0
        %1901 = vmatpush1.bf16.msra.mxu0 0
        %1902 = vmatprep.subr.bf16.mxu0 0
        %1903 = vmatpush1.bf16.msra.mxu0 0
        %1904 = vmatprep.subr.bf16.mxu0 0
        %1905 = vmatpush1.bf16.msra.mxu0 0
        %1906 = vmatprep.subr.bf16.mxu0 0
        %1907 = vmatpush1.bf16.msra.mxu0 0
        %1908 = vmatprep.subr.bf16.mxu0 0
        %1909 = vmatpush1.bf16.msra.mxu0 0
        %1910 = vmatprep.subr.bf16.mxu0 0
        %1911 = vmatpush1.bf16.msra.mxu0 0
        %1912 = vmatprep.subr.bf16.mxu0 0
        %1913 = vmatpush1.bf16.msra.mxu0 0
        %1914 = vmatprep.subr.bf16.mxu0 0
        %1915 = vmatpush1.bf16.msra.mxu0 0
        %1916 = vmatprep.subr.bf16.mxu0 0
        %1917 = vmatpush1.bf16.msra.mxu0 0
        %1918 = vmatprep.subr.bf16.mxu0 0
        %1919 = vmatpush1.bf16.msra.mxu0 0
        %1920 = vmatprep.subr.bf16.mxu0 0
        %1921 = vmatpush1.bf16.msra.mxu0 0
        %1922 = vmatprep.subr.bf16.mxu0 0
        %1923 = vmatpush1.bf16.msra.mxu0 0
        %1924 = vmatprep.mubr.bf16.mxu0 0
        %1925 = vmatmul.mubr.bf16.gmra.mrb[0].mxu0 %v1887
        %v1926 = vpop.f32.mrb[0].mxu0
        %v1927 = vadd.f32 0.0, %v1926
        %v1928 = vpop.f32.mrb[0].mxu0
        %v1929 = vpop.f32.mrb[0].mxu0
        %v1930 = vpop.f32.mrb[0].mxu0
        %1931 = vdwg.mxu0
        %v1932 = vadd.f32 %v1723, %v1789
        %v1933 = vadd.f32 %v1724, %v1835
        %v1934 = vadd.f32 %v1725, %v1881
        %v1935 = vadd.f32 %v1726, %v1927
        %v1936 = vrcp.pop %v1739
        %v1937 = vrcp.pop %v1740
        %v1938 = vrcp.pop %v1741
        %v1939 = vrcp.pop %v1742
        %v1940 = vmul.f32 %v1932, %v1936
        %v1941 = vmul.f32 %v1933, %v1937
        %v1942 = vmul.f32 %v1934, %v1938
        %v1943 = vmul.f32 %v1935, %v1939
        %v1944 = vpack.c.bf16 %v1940, %v1940
        %v1946 = vunpack.c.l.s4 1983009808
        %v1947 = vunpack.c.0.s8 %v1946
        %v1948 = vlaneseq
        %v1949 = vshrl.u32 %v1948, 7
        %v1950 = vsub.s32 %v1947, %v1949
        %v1951 = vrot.slane %v1944, %v1950
        %v1952 = vpack.c.bf16 %v1942, %v1942
        %v1954 = vunpack.c.l.s4 1983009808
        %v1955 = vunpack.c.0.s8 %v1954
        %v1956 = vlaneseq
        %v1957 = vshrl.u32 %v1956, 7
        %v1958 = vsub.s32 %v1955, %v1957
        %v1959 = vrot.slane %v1952, %v1958
        %v1960 = vcombine.low %v1951, %v1959
        %v1961 = vcombine.high %v1951, %v1959
        %v1963 = vunpack.c.l.s4 1934713408
        %v1964 = vunpack.c.0.s8 %v1963
        %v1965 = vlaneseq
        %v1966 = vshrl.u32 %v1965, 7
        %v1967 = vsub.s32 %v1964, %v1966
        %v1968 = vrot.slane %v1960, %v1967
        %v1970 = vunpack.c.l.s4 1934713408
        %v1971 = vunpack.c.0.s8 %v1970
        %v1972 = vlaneseq
        %v1973 = vshrl.u32 %v1972, 7
        %v1974 = vsub.s32 %v1971, %v1973
        %v1975 = vrot.slane %v1961, %v1974
        %v1976 = vcombine.high %v1968, 0
        %v1977 = vcombine.high %v1975, 0
        %v1978 = vpack.c.bf16 %v1941, %v1941
        %v1980 = vunpack.c.l.s4 1983009808
        %v1981 = vunpack.c.0.s8 %v1980
        %v1982 = vlaneseq
        %v1983 = vshrl.u32 %v1982, 7
        %v1984 = vsub.s32 %v1981, %v1983
        %v1985 = vrot.slane %v1978, %v1984
        %v1986 = vpack.c.bf16 %v1943, %v1943
        %v1988 = vunpack.c.l.s4 1983009808
        %v1989 = vunpack.c.0.s8 %v1988
        %v1990 = vlaneseq
        %v1991 = vshrl.u32 %v1990, 7
        %v1992 = vsub.s32 %v1989, %v1991
        %v1993 = vrot.slane %v1986, %v1992
        %v1994 = vcombine.low %v1985, %v1993
        %v1995 = vcombine.high %v1985, %v1993
        %v1997 = vunpack.c.l.s4 1934713408
        %v1998 = vunpack.c.0.s8 %v1997
        %v1999 = vlaneseq
        %v2000 = vshrl.u32 %v1999, 7
        %v2001 = vsub.s32 %v1998, %v2000
        %v2002 = vrot.slane %v1994, %v2001
        %v2004 = vunpack.c.l.s4 1934713408
        %v2005 = vunpack.c.0.s8 %v2004
        %v2006 = vlaneseq
        %v2007 = vshrl.u32 %v2006, 7
        %v2008 = vsub.s32 %v2005, %v2007
        %v2009 = vrot.slane %v1995, %v2008
        %v2010 = vcombine.high %v2002, 0
        %v2011 = vcombine.high %v2009, 0
        %v2014 = vpack.i.b16 %v2002, %v1968
        %v2016 = vshrl.u32 %v1968, 16
        %v2017 = vshrl.u32 %v2002, 16
        %v2018 = vpack.i.b16 %v2017, %v2016
        %v2022 = vpack.i.b16 %v2010, %v1976
        %v2024 = vshrl.u32 %v1976, 16
        %v2025 = vshrl.u32 %v2010, 16
        %v2026 = vpack.i.b16 %v2025, %v2024
        %v2030 = vpack.i.b16 %v2009, %v1975
        %v2032 = vshrl.u32 %v1975, 16
        %v2033 = vshrl.u32 %v2009, 16
        %v2034 = vpack.i.b16 %v2033, %v2032
        %v2038 = vpack.i.b16 %v2011, %v1977
        %v2040 = vshrl.u32 %v1977, 16
        %v2041 = vshrl.u32 %v2011, 16
        %v2042 = vpack.i.b16 %v2041, %v2040
        %v2044 = vcombine.low %v2014, %v2030
        %v2046 = vunpack.c.l.s4 1983009808
        %v2047 = vunpack.c.0.s8 %v2046
        %v2048 = vlaneseq
        %v2049 = vshrl.u32 %v2048, 7
        %v2050 = vsub.s32 %v2047, %v2049
        %v2051 = vrot.slane %v2044, %v2050
        %v2052 = vcombine.low %v2022, %v2038
        %v2054 = vunpack.c.l.s4 1983009808
        %v2055 = vunpack.c.0.s8 %v2054
        %v2056 = vlaneseq
        %v2057 = vshrl.u32 %v2056, 7
        %v2058 = vsub.s32 %v2055, %v2057
        %v2059 = vrot.slane %v2052, %v2058
        %v2060 = vcombine.low %v2051, %v2059
        %v2062 = vunpack.c.l.s4 1934713408
        %v2063 = vunpack.c.0.s8 %v2062
        %v2064 = vlaneseq
        %v2065 = vshrl.u32 %v2064, 7
        %v2066 = vsub.s32 %v2063, %v2065
        %v2067 = vrot.slane %v2060, %v2066
        %v2068 = vcombine.high %v2067, 0
        %v2069 = vcombine.low %v2018, %v2034
        %v2071 = vunpack.c.l.s4 1983009808
        %v2072 = vunpack.c.0.s8 %v2071
        %v2073 = vlaneseq
        %v2074 = vshrl.u32 %v2073, 7
        %v2075 = vsub.s32 %v2072, %v2074
        %v2076 = vrot.slane %v2069, %v2075
        %v2077 = vcombine.low %v2026, %v2042
        %v2079 = vunpack.c.l.s4 1983009808
        %v2080 = vunpack.c.0.s8 %v2079
        %v2081 = vlaneseq
        %v2082 = vshrl.u32 %v2081, 7
        %v2083 = vsub.s32 %v2080, %v2082
        %v2084 = vrot.slane %v2077, %v2083
        %v2085 = vcombine.low %v2076, %v2084
        %v2087 = vunpack.c.l.s4 1934713408
        %v2088 = vunpack.c.0.s8 %v2087
        %v2089 = vlaneseq
        %v2090 = vshrl.u32 %v2089, 7
        %v2091 = vsub.s32 %v2088, %v2090
        %v2092 = vrot.slane %v2085, %v2091
        %v2093 = vcombine.high %v2092, 0
        %v2096 = vpack.i.b16 %v2092, %v2067
        %v2097 = vshrl.u32 %v2067, 16
        %v2098 = vshrl.u32 %v2092, 16
        %v2099 = vpack.i.b16 %v2098, %v2097
        %v2102 = vpack.i.b16 %v2093, %v2068
        %v2103 = vshrl.u32 %v2068, 16
        %v2104 = vshrl.u32 %v2093, 16
        %v2105 = vpack.i.b16 %v2104, %v2103
        %2106 = vrot.lane.b32.xlu0 %v2099, 8
        %v2107 = vpop.permute.xlu0 %2106
        %2108 = vrot.lane.b32.xlu0 %v2102, 16
        %v2109 = vpop.permute.xlu0 %2108
        %2110 = vrot.lane.b32.xlu0 %v2105, 24
        %v2111 = vpop.permute.xlu0 %2110
        %v2114 = vsel %vm1502, %v2096, %v2107
        %vm2115 = vcmask 130048
        %v2117 = vsel %vm2115, %v2114, %v2109
        %vm2118 = vcmask 195584
        %v2120 = vsel %vm2118, %v2117, %v2111
        %v2121 = vld [vmem:[#allocation12] sm:$0xf]
        %v2122 = vld [vmem:[#allocation12 + $0x4] sm:$0xf]
        %v2123 = vld [vmem:[#allocation12 + $0x8] sm:$0xf]
        %v2124 = vld [vmem:[#allocation12 + $0xc] sm:$0xf]
        %v2125 = vld [vmem:[#allocation13] sm:$0x1]
        %v2127 = vlaneseq
        %v2128 = vshrl.u32 %v2127, 7
        %v2129 = vsub.s32 0, %v2128
        %v2130 = vrot.slane %v2125, %v2129
        %v2136 = vunpack.c.l.b16 %v2121
        %v2137 = vunpack.c.l.b16 %v2122
        %v2138 = vunpack.c.l.b16 %v2123
        %v2139 = vunpack.c.l.b16 %v2124
        %v2140 = vpack.c.b16 %v2137, %v2136
        %v2141 = vpack.c.b16 %v2139, %v2138
        %v2144 = vsel %vm1213, %v2120, 0
        %2146 = vmatprep.subr.bf16.mxu0 0
        %2147 = vmatpush1.bf16.msra.mxu0 %v2140
        %2148 = vmatprep.subr.bf16.mxu0 0
        %2149 = vmatpush1.bf16.msra.mxu0 %v2141
        %2150 = vmatprep.subr.bf16.mxu0 0
        %2151 = vmatpush1.bf16.msra.mxu0 0
        %2152 = vmatprep.subr.bf16.mxu0 0
        %2153 = vmatpush1.bf16.msra.mxu0 0
        %2154 = vmatprep.subr.bf16.mxu0 0
        %2155 = vmatpush1.bf16.msra.mxu0 0
        %2156 = vmatprep.subr.bf16.mxu0 0
        %2157 = vmatpush1.bf16.msra.mxu0 0
        %2158 = vmatprep.subr.bf16.mxu0 0
        %2159 = vmatpush1.bf16.msra.mxu0 0
        %2160 = vmatprep.subr.bf16.mxu0 0
        %2161 = vmatpush1.bf16.msra.mxu0 0
        %2162 = vmatprep.subr.bf16.mxu0 0
        %2163 = vmatpush1.bf16.msra.mxu0 0
        %2164 = vmatprep.subr.bf16.mxu0 0
        %2165 = vmatpush1.bf16.msra.mxu0 0
        %2166 = vmatprep.subr.bf16.mxu0 0
        %2167 = vmatpush1.bf16.msra.mxu0 0
        %2168 = vmatprep.subr.bf16.mxu0 0
        %2169 = vmatpush1.bf16.msra.mxu0 0
        %2170 = vmatprep.subr.bf16.mxu0 0
        %2171 = vmatpush1.bf16.msra.mxu0 0
        %2172 = vmatprep.subr.bf16.mxu0 0
        %2173 = vmatpush1.bf16.msra.mxu0 0
        %2174 = vmatprep.subr.bf16.mxu0 0
        %2175 = vmatpush1.bf16.msra.mxu0 0
        %2176 = vmatprep.subr.bf16.mxu0 0
        %2177 = vmatpush1.bf16.msra.mxu0 0
        %2178 = vmatprep.mubr.bf16.mxu0 0
        %2179 = vmatmul.mubr.bf16.gmra.mrb[0].mxu0 %v2144
        %v2180 = vpop.f32.mrb[0].mxu0
        %v2181 = vadd.f32 %v2130, %v2180
        %v2182 = vpop.f32.mrb[0].mxu0
        %v2183 = vpop.f32.mrb[0].mxu0
        %v2184 = vpop.f32.mrb[0].mxu0
        %2185 = vdwg.mxu0
        %v2186 = vadd.f32 %v1210, %v2181
        %v2187 = vld [vmem:[%s16] sm:$0x1]
        %v2188 = vld [vmem:[%s17] sm:$0x1]
        %v2189 = vsel %vm1213, %v2186, 0.0
        %2190 = vadd.xlane.f32.xlu0 %v2189
        %v2191 = vpop.xlane.xlu0 %2190
        %v2192 = vmul.f32 %v2191, %v1217
        %v2193 = vsub.f32 %v2186, %v2192
        %v2194 = vmul.f32 %v2193, %v2193
        %v2195 = vsel %vm1213, %v2194, 0.0
        %2196 = vadd.xlane.f32.xlu0 %v2195
        %v2197 = vpop.xlane.xlu0 %2196
        %v2198 = vmul.f32 %v2197, 0.032258064
        %v2199 = vrsqrt.pop %v2198
        %v2200 = vmul.f32 %v2198, %v2199
        %vm2201 = vcmp.eq.f32.partialorder %v2198, inf
        %v2202 = vsel %vm2201, %v2198, %v2200
        %vm2203 = vcmp.eq.f32.partialorder %v2198, 0.0
        %v2204 = vand.u32 %v2198, 2147483648
        %v2205 = vsel %vm2203, %v2204, %v2202
        %v2206 = vadd.f32 %v2205, 1e-06
        %v2207 = vrcp.pop %v2206
        %v2209 = vlaneseq
        %v2210 = vshrl.u32 %v2209, 7
        %v2211 = vsub.s32 0, %v2210
        %v2212 = vrot.slane %v2187, %v2211
        %v2214 = vmul.f32 %v2212, %v2193
        %v2215 = vmul.f32 %v2214, %v2207
        %v2217 = vlaneseq
        %v2218 = vshrl.u32 %v2217, 7
        %v2219 = vsub.s32 0, %v2218
        %v2220 = vrot.slane %v2188, %v2219
        %v2222 = vadd.f32 %v2215, %v2220
        %v2223 = vpack.c.bf16 %v2222, %v2222
        %v2224 = vld [vmem:[%s15] sm:$0x1]
        %v2226 = vlaneseq
        %v2227 = vshrl.u32 %v2226, 7
        %v2228 = vsub.s32 0, %v2227
        %v2229 = vrot.slane %v2224, %v2228
        %v2231 = vadd.f32 %v2229, 0.0
        %v2232 = vld [vmem:[%s12] sm:$0xf]
        %v2233 = vld [vmem:[%s12 + $0x4] sm:$0xf]
        %v2234 = vld [vmem:[%s12 + $0x8] sm:$0xf]
        %v2235 = vld [vmem:[%s12 + $0xc] sm:$0xf]
        %v2236 = vld [vmem:[%s13] sm:$0x1]
        %v2238 = vlaneseq
        %v2239 = vshrl.u32 %v2238, 7
        %v2240 = vsub.s32 0, %v2239
        %v2241 = vrot.slane %v2236, %v2240
        %v2247 = vunpack.c.l.b16 %v2232
        %v2248 = vunpack.c.l.b16 %v2233
        %v2249 = vunpack.c.l.b16 %v2234
        %v2250 = vunpack.c.l.b16 %v2235
        %v2251 = vpack.c.b16 %v2248, %v2247
        %v2252 = vpack.c.b16 %v2250, %v2249
        %v2256 = vsel %vm1213, %v2223, 0
        %2258 = vmatprep.subr.bf16.mxu0 0
        %2259 = vmatpush1.bf16.msra.mxu0 %v2251
        %2260 = vmatprep.subr.bf16.mxu0 0
        %2261 = vmatpush1.bf16.msra.mxu0 %v2252
        %2262 = vmatprep.subr.bf16.mxu0 0
        %2263 = vmatpush1.bf16.msra.mxu0 0
        %2264 = vmatprep.subr.bf16.mxu0 0
        %2265 = vmatpush1.bf16.msra.mxu0 0
        %2266 = vmatprep.subr.bf16.mxu0 0
        %2267 = vmatpush1.bf16.msra.mxu0 0
        %2268 = vmatprep.subr.bf16.mxu0 0
        %2269 = vmatpush1.bf16.msra.mxu0 0
        %2270 = vmatprep.subr.bf16.mxu0 0
        %2271 = vmatpush1.bf16.msra.mxu0 0
        %2272 = vmatprep.subr.bf16.mxu0 0
        %2273 = vmatpush1.bf16.msra.mxu0 0
        %2274 = vmatprep.subr.bf16.mxu0 0
        %2275 = vmatpush1.bf16.msra.mxu0 0
        %2276 = vmatprep.subr.bf16.mxu0 0
        %2277 = vmatpush1.bf16.msra.mxu0 0
        %2278 = vmatprep.subr.bf16.mxu0 0
        %2279 = vmatpush1.bf16.msra.mxu0 0
        %2280 = vmatprep.subr.bf16.mxu0 0
        %2281 = vmatpush1.bf16.msra.mxu0 0
        %2282 = vmatprep.subr.bf16.mxu0 0
        %2283 = vmatpush1.bf16.msra.mxu0 0
        %2284 = vmatprep.subr.bf16.mxu0 0
        %2285 = vmatpush1.bf16.msra.mxu0 0
        %2286 = vmatprep.subr.bf16.mxu0 0
        %2287 = vmatpush1.bf16.msra.mxu0 0
        %2288 = vmatprep.subr.bf16.mxu0 0
        %2289 = vmatpush1.bf16.msra.mxu0 0
        %2290 = vmatprep.mubr.bf16.mxu0 0
        %2291 = vmatmul.mubr.bf16.gmra.mrb[0].mxu0 %v2256
        %v2292 = vpop.f32.mrb[0].mxu0
        %v2293 = vadd.f32 %v2241, %v2292
        %v2294 = vpop.f32.mrb[0].mxu0
        %v2295 = vpop.f32.mrb[0].mxu0
        %v2296 = vpop.f32.mrb[0].mxu0
        %2297 = vdwg.mxu0
        %v2298 = vmax.f32 %v2293, 0.0
        %v2299 = vpack.c.bf16 %v2298, %v2298
        %v2300 = vld [vmem:[%s14] sm:$0xf]
        %v2301 = vld [vmem:[%s14 + $0x4] sm:$0xf]
        %v2302 = vld [vmem:[%s14 + $0x8] sm:$0xf]
        %v2303 = vld [vmem:[%s14 + $0xc] sm:$0xf]
        %v2304 = vld [vmem:[%s14 + $0x10] sm:$0xf]
        %v2305 = vld [vmem:[%s14 + $0x14] sm:$0xf]
        %v2306 = vld [vmem:[%s14 + $0x18] sm:$0xf]
        %v2307 = vld [vmem:[%s14 + $0x1c] sm:$0xf]
        %v2316 = vunpack.c.l.b16 %v2300
        %v2317 = vunpack.c.l.b16 %v2301
        %v2318 = vunpack.c.l.b16 %v2302
        %v2319 = vunpack.c.l.b16 %v2303
        %v2320 = vunpack.c.l.b16 %v2304
        %v2321 = vunpack.c.l.b16 %v2305
        %v2322 = vunpack.c.l.b16 %v2306
        %v2323 = vunpack.c.l.b16 %v2307
        %v2324 = vpack.c.b16 %v2317, %v2316
        %v2325 = vpack.c.b16 %v2319, %v2318
        %v2326 = vpack.c.b16 %v2321, %v2320
        %v2327 = vpack.c.b16 %v2323, %v2322
        %vm2332 = vcmask 523264
        %v2334 = vsel %vm2332, %v2299, 0
        %2336 = vmatprep.subr.bf16.mxu0 0
        %2337 = vmatpush1.bf16.msra.mxu0 %v2324
        %2338 = vmatprep.subr.bf16.mxu0 0
        %2339 = vmatpush1.bf16.msra.mxu0 %v2325
        %2340 = vmatprep.subr.bf16.mxu0 0
        %2341 = vmatpush1.bf16.msra.mxu0 %v2326
        %2342 = vmatprep.subr.bf16.mxu0 0
        %2343 = vmatpush1.bf16.msra.mxu0 %v2327
        %2344 = vmatprep.subr.bf16.mxu0 0
        %2345 = vmatpush1.bf16.msra.mxu0 0
        %2346 = vmatprep.subr.bf16.mxu0 0
        %2347 = vmatpush1.bf16.msra.mxu0 0
        %2348 = vmatprep.subr.bf16.mxu0 0
        %2349 = vmatpush1.bf16.msra.mxu0 0
        %2350 = vmatprep.subr.bf16.mxu0 0
        %2351 = vmatpush1.bf16.msra.mxu0 0
        %2352 = vmatprep.subr.bf16.mxu0 0
        %2353 = vmatpush1.bf16.msra.mxu0 0
        %2354 = vmatprep.subr.bf16.mxu0 0
        %2355 = vmatpush1.bf16.msra.mxu0 0
        %2356 = vmatprep.subr.bf16.mxu0 0
        %2357 = vmatpush1.bf16.msra.mxu0 0
        %2358 = vmatprep.subr.bf16.mxu0 0
        %2359 = vmatpush1.bf16.msra.mxu0 0
        %2360 = vmatprep.subr.bf16.mxu0 0
        %2361 = vmatpush1.bf16.msra.mxu0 0
        %2362 = vmatprep.subr.bf16.mxu0 0
        %2363 = vmatpush1.bf16.msra.mxu0 0
        %2364 = vmatprep.subr.bf16.mxu0 0
        %2365 = vmatpush1.bf16.msra.mxu0 0
        %2366 = vmatprep.subr.bf16.mxu0 0
        %2367 = vmatpush1.bf16.msra.mxu0 0
        %2368 = vmatprep.mubr.bf16.mxu0 0
        %2369 = vmatmul.mubr.bf16.gmra.mrb[0].mxu0 %v2334
        %v2370 = vpop.f32.mrb[0].mxu0
        %v2371 = vadd.f32 0.0, %v2370
        %v2372 = vpop.f32.mrb[0].mxu0
        %v2373 = vpop.f32.mrb[0].mxu0
        %v2374 = vpop.f32.mrb[0].mxu0
        %2375 = vdwg.mxu0
        %v2376 = vadd.f32 %v2231, %v2371
        %v2377 = vadd.f32 %v2186, %v2376
        %2378 = vst.msk [vmem:[%s671] sm:$0xff] %vm1213, %v2377
        %s2379 = sand.u32 %s446, 1
        %s2380 = scalar_lea.sflag [#allocation6], %s2379
        %s2381 = sand.u32 %s446, 1
        %s2382 = smul.addr %s2381, 8
        %s2383 = scalar_lea.vmem [#allocation15], %s2382
        // Predicated region
        $region121: #{tpu_custom_call.1} parent=91 // pred_check
          %p2384 = pneg %p456
        $region122: #{tpu_custom_call.1} parent=91 // pred_check_branch
          %2386 = sbr.rel (%p2384) target = $region124
        $region123: #{tpu_custom_call.1} parent=91 // pred_region
          %s2388 = ssub.s32 128, 128
          %2389 = vsyncadd %s2380, %s2388
          %s2390 = sadd.s32 %s41, %s40
          %s2391 = smul.addr %s2390, 128
          %s2392 = scalar_lea.hbm %s18, %s2391
          %s2394 = sshll.u32 %s2383, 4
          %s2395 = int_to_ptr.vmem [resolvable:$true] %s2394
          %2397 = dma.vmem_to_hbm [thread:$0]  %s2395, 128, %s2392, %s2380
        $region124: #{tpu_custom_call.1} parent=91 // pred_fallthru
          _
      $region92: #{tpu_custom_call.1} parent=5 // pred_fallthru
        _
      %p2398 = scmp.le.s32.totalorder 2, %s31
      // Predicated region
      $region125: #{tpu_custom_call.1} parent=5 // pred_check
        %p2399 = pneg %p2398
      $region126: #{tpu_custom_call.1} parent=5 // pred_check_branch
        %2401 = sbr.rel (%p2399) target = $region128
      $region127: #{tpu_custom_call.1} parent=5 // pred_region
        %s2402 = ssub.s32 %s31, 2
        // Predicated region
        $region129: #{tpu_custom_call.1} parent=127 // pred_check
          %p2403 = pneg %p462
        $region130: #{tpu_custom_call.1} parent=127 // pred_check_branch
          %2405 = sbr.rel (%p2403) target = $region132
        $region131: #{tpu_custom_call.1} parent=127 // pred_region
          %s2406 = sand.u32 %s447, 1
          %s2407 = scalar_lea.sflag [#allocation6], %s2406
          %s2408 = sand.u32 %s447, 1
          %s2409 = smul.addr %s2408, 8
          %s2410 = scalar_lea.vmem [#allocation15], %s2409
          %2411 = dma.done %s2407, 128
        $region132: #{tpu_custom_call.1} parent=127 // pred_fallthru
          _
      $region128: #{tpu_custom_call.1} parent=5 // pred_fallthru
        _
    $region6: #{tpu_custom_call.1} parent=1 // loop_footer
      %s35 = sadd.s32 1, %s31
    $region7: #{tpu_custom_call.1} parent=1 // loop_footer_branch
      %30 = sbr.rel target = $region3
    $region8: #{tpu_custom_call.1} parent=1 // loop_exit
      _
    %2412 = vsyncpa [#allocation5], 1
    %s2413 = scalar_lea.sflag [#allocation5], 1
    %2414 = vsyncpa %s2413, 1
    %2415 = vsyncpa [#allocation8], 1
    %2416 = vsyncpa [#allocation11], 1
    %2417 = vsyncpa [#allocation14], 1
    %2418 = vsyncpa [#allocation6], 1
    %s2419 = scalar_lea.sflag [#allocation6], 1
    %2420 = vsyncpa %s2419, 1

</llo_original>
